<compile_context>
chip_gen: v6e
topology: v6e:2x2x1
jax: 0.10.0
libtpu: 0.0.40
codegen_flags: <defaults>
</compile_context>

<pallas_src>
import functools

import jax
import jax.numpy as jnp
from jax import lax
from jax.experimental import pallas as pl
from jax.experimental.pallas import tpu as pltpu


# ----------------------------------------------------------------------------
# Fused kernel: one projection matmul + per-channel (batched) attention
# ----------------------------------------------------------------------------
def her_attention_kernel(patch_ref, w_ref, out_ref, *, c_out, h_out, w_out,
                         batch_tile, mm_dtype):
    f32 = jnp.float32
    hw = h_out * w_out

    w_blk = w_ref[...]                       # (3*C_out, Pc) in mm_dtype (pre-cast)

    q_parts, v_parts, k_parts = [], [], []
    for bi in range(batch_tile):             # static, unrolled (batch_tile small)
        p = patch_ref[bi]                    # (Pc, HW) lane-dense, mm_dtype
        # Fused q/v/k projection: dw-conv + BN + 1x1 conv + bias + softmax scale
        # all folded into one MXU matmul on the im2col patches.
        proj = jnp.dot(w_blk, p, preferred_element_type=f32)      # (3*C_out, HW)
        proj = proj.reshape(3 * c_out, h_out, w_out)              # single retile
        q_parts.append(proj[:c_out])
        v_parts.append(proj[c_out:2 * c_out])
        k_parts.append(proj[2 * c_out:])

    q = jnp.concatenate(q_parts, axis=0)     # (bt*C_out, H, W), 1/sqrt(W) folded in
    v = jnp.concatenate(v_parts, axis=0)
    k = jnp.concatenate(k_parts, axis=0)

    # Per-channel scaled dot-product attention as batched MXU matmuls
    # (only the block-diagonal scores are computed -- no (C*H)^2 buffers, no mask).
    dots = jnp.einsum('chd,cjd->chj', q.astype(mm_dtype), k.astype(mm_dtype),
                      preferred_element_type=f32)                 # (bt*C, H, H)

    m = jnp.max(dots, axis=-1, keepdims=True)
    e = jnp.exp(dots - m)
    denom = jnp.sum(e, axis=-1, keepdims=True)
    r = pl.reciprocal(denom, approx=True)    # EUP slot
    r = r * (2.0 - denom * r)                # one Newton step -> ~f32 accuracy
    attn = e * r

    out = jnp.einsum('chj,cjd->chd', attn.astype(mm_dtype), v.astype(mm_dtype),
                     preferred_element_type=f32)                  # (bt*C, H, W)

    # lane-dense (batch_tile, C_out, H*W) store (the one remaining retile)
    out_ref[...] = out.reshape(batch_tile, c_out, hw).astype(out_ref.dtype)


# ----------------------------------------------------------------------------
# Wrapper-side folding (BN inference stats, depthwise->pointwise, bias, scale)
# ----------------------------------------------------------------------------
def _fold_projection(p, *, extra_scale=1.0):
    eps = 1e-5
    c_in, ks, _ = p['dw_w'].shape
    bn_scale = p['bn_gamma'] / jnp.sqrt(p['bn_var'] + eps)            # (C_in,)
    dw_eff = p['dw_w'] * bn_scale[:, None, None]                      # (C_in,K,K)
    dwb_eff = bn_scale * (p['dw_b'] - p['bn_mean']) + p['bn_beta']    # (C_in,)
    dwf = dw_eff.reshape(c_in, ks * ks)                               # (C_in, KK)
    # W[o, t*C_in + c] = pw[o, c] * dw_eff[c, t]   (t = kh*K + kw)
    w = (p['pw_w'][:, None, :] * dwf.T[None, :, :]).reshape(-1, ks * ks * c_in)
    bias = p['pw_w'] @ dwb_eff + p['pw_b']                            # (C_out,)
    return w * extra_scale, bias * extra_scale


def _im2col(xp, *, kernel_size, stride, dilation, h_out, w_out):
    b, c_in = xp.shape[0], xp.shape[1]
    taps = []
    for kh in range(kernel_size):
        for kw in range(kernel_size):
            h0, w0 = kh * dilation, kw * dilation
            taps.append(xp[:, :, h0:h0 + (h_out - 1) * stride + 1:stride,
                                 w0:w0 + (w_out - 1) * stride + 1:stride])
    p = jnp.stack(taps, axis=1)              # (B, KK, C_in, h_out, w_out)
    return p.reshape(b, kernel_size * kernel_size * c_in, h_out * w_out)


def her_guided_self_attention(x, her, params, *, kernel_size, stride=1, padding=0,
                              dilation=1, batch_tile=1, use_bf16_matmul=False):
    assert x.shape == her.shape, "x and her_feature must share a shape"
    b, c_in, h, w = x.shape
    assert b % batch_tile == 0, "batch must be divisible by batch_tile"
    c_out = params['q']['pw_w'].shape[0]
    h_out = (h + 2 * padding - dilation * (kernel_size - 1) - 1) // stride + 1
    w_out = (w + 2 * padding - dilation * (kernel_size - 1) - 1) // stride + 1
    hw = h_out * w_out
    kkc = kernel_size * kernel_size * c_in
    pc = 2 * kkc + 1                         # x taps | her taps | ones (bias row)

    pad = ((0, 0), (0, 0), (padding, padding), (padding, padding))
    px = _im2col(jnp.pad(x, pad), kernel_size=kernel_size, stride=stride,
                 dilation=dilation, h_out=h_out, w_out=w_out)     # (B, KKC, HW)
    ph = _im2col(jnp.pad(her, pad), kernel_size=kernel_size, stride=stride,
                 dilation=dilation, h_out=h_out, w_out=w_out)     # (B, KKC, HW)
    ones = jnp.ones((b, 1, hw), x.dtype)
    patches = jnp.concatenate([px, ph, ones], axis=1)             # (B, Pc, HW)

    attn_scale = (1.0 / float(w_out)) ** 0.5
    wq, bq = _fold_projection(params['q'], extra_scale=attn_scale)
    wk, bk = _fold_projection(params['k'])
    wv, bv = _fold_projection(params['v'])
    zeros = jnp.zeros_like(wq)
    # Block-diagonal weight: [q; v] rows read x's patch columns, [k] rows read
    # her's patch columns; the trailing column (times the ones row) is the bias.
    w_blk = jnp.concatenate([
        jnp.concatenate([wq, zeros, bq[:, None]], axis=1),
        jnp.concatenate([wv, zeros, bv[:, None]], axis=1),
        jnp.concatenate([zeros, wk, bk[:, None]], axis=1),
    ], axis=0)                                                    # (3*C_out, Pc)

    mm_dtype = jnp.bfloat16 if use_bf16_matmul else jnp.float32
    patches = patches.astype(mm_dtype)
    w_blk = w_blk.astype(mm_dtype)

    kernel = functools.partial(her_attention_kernel, c_out=c_out, h_out=h_out,
                               w_out=w_out, batch_tile=batch_tile,
                               mm_dtype=mm_dtype)

    n_steps = b // batch_tile
    flops = b * (2 * (3 * c_out) * pc * hw + 4 * c_out * h_out * h_out * w_out)
    cost = pl.CostEstimate(
        flops=flops,
        transcendentals=b * (c_out * h_out * h_out + c_out * h_out),
        bytes_accessed=(patches.size * patches.dtype.itemsize
                        + n_steps * w_blk.size * w_blk.dtype.itemsize
                        + b * c_out * hw * 4))

    out_flat = pl.pallas_call(
        kernel,
        out_shape=jax.ShapeDtypeStruct((b, c_out, hw), jnp.float32),
        grid=(n_steps,),
        in_specs=[
            pl.BlockSpec((batch_tile, pc, hw), lambda i: (i, 0, 0)),
            pl.BlockSpec((3 * c_out, pc), lambda i: (0, 0)),   # VMEM-resident weights
        ],
        out_specs=pl.BlockSpec((batch_tile, c_out, hw), lambda i: (i, 0, 0)),
        compiler_params=pltpu.CompilerParams(
            dimension_semantics=("parallel",),
            vmem_limit_bytes=32 * 1024 * 1024),
        cost_estimate=cost,
    )(patches, w_blk)

    # free contiguous reshape back to NCHW outside the kernel
    return out_flat.reshape(b, c_out, h_out, w_out)


# ----------------------------------------------------------------------------
# Pure-JAX reference (mirrors the PyTorch forward, BN in inference mode)
# ----------------------------------------------------------------------------
def _dwsep_ref(x, p, *, kernel_size, stride, padding, dilation):
    c_in = x.shape[1]
    dw = lax.conv_general_dilated(
        x, p['dw_w'][:, None, :, :],
        window_strides=(stride, stride),
        padding=[(padding, padding), (padding, padding)],
        rhs_dilation=(dilation, dilation),
        dimension_numbers=('NCHW', 'OIHW', 'NCHW'),
        feature_group_count=c_in,
        precision=lax.Precision.HIGHEST)
    dw = dw + p['dw_b'][None, :, None, None]
    eps = 1e-5
    bn = ((dw - p['bn_mean'][None, :, None, None])
          / jnp.sqrt(p['bn_var'][None, :, None, None] + eps)
          * p['bn_gamma'][None, :, None, None]
          + p['bn_beta'][None, :, None, None])
    pw = lax.conv_general_dilated(
        bn, p['pw_w'][:, :, None, None], (1, 1), [(0, 0), (0, 0)],
        dimension_numbers=('NCHW', 'OIHW', 'NCHW'),
        precision=lax.Precision.HIGHEST)
    return pw + p['pw_b'][None, :, None, None]


def her_guided_self_attention_ref(x, her, params, **conv_kw):
    q = _dwsep_ref(x, params['q'], **conv_kw)
    k = _dwsep_ref(her, params['k'], **conv_kw)
    v = _dwsep_ref(x, params['v'], **conv_kw)
    dots = jnp.einsum('bhid,bhjd->bhij', q, k,
                      precision=lax.Precision.HIGHEST) * (1.0 / q.shape[-1]) ** 0.5
    attn = jax.nn.softmax(dots, axis=-1)
    return jnp.einsum('bhij,bhjd->bhid', attn, v, precision=lax.Precision.HIGHEST)


# ----------------------------------------------------------------------------
# Deterministic parameter init (synthetic, matches module shapes)
# ----------------------------------------------------------------------------
def init_projection_params(key, c_in, c_out, kernel_size):
    ks = jax.random.split(key, 8)
    return dict(
        dw_w=0.2 * jax.random.normal(ks[0], (c_in, kernel_size, kernel_size), jnp.float32),
        dw_b=0.1 * jax.random.normal(ks[1], (c_in,), jnp.float32),
        bn_gamma=1.0 + 0.1 * jax.random.normal(ks[2], (c_in,), jnp.float32),
        bn_beta=0.1 * jax.random.normal(ks[3], (c_in,), jnp.float32),
        bn_mean=0.1 * jax.random.normal(ks[4], (c_in,), jnp.float32),
        bn_var=jnp.abs(1.0 + 0.1 * jax.random.normal(ks[5], (c_in,), jnp.float32)),
        pw_w=0.2 * jax.random.normal(ks[6], (c_out, c_in), jnp.float32),
        pw_b=0.1 * jax.random.normal(ks[7], (c_out,), jnp.float32),
    )


if __name__ == "__main__":
    B, C_IN, C_OUT, H, W = 2, 4, 8, 16, 16
    KERNEL_SIZE, STRIDE, PADDING = 3, 1, 1

    root = jax.random.PRNGKey(0)
    kx, khf, kq, kk, kv = jax.random.split(root, 5)
    x = jax.random.normal(kx, (B, C_IN, H, W), jnp.float32)
    her_feature = jax.random.normal(khf, (B, C_IN, H, W), jnp.float32)

    params = {
        'q': init_projection_params(kq, C_IN, C_OUT, KERNEL_SIZE),
        'k': init_projection_params(kk, C_IN, C_OUT, KERNEL_SIZE),
        'v': init_projection_params(kv, C_IN, C_OUT, KERNEL_SIZE),
    }

    conv_kw = dict(kernel_size=KERNEL_SIZE, stride=STRIDE, padding=PADDING, dilation=1)

    ref = jax.block_until_ready(
        her_guided_self_attention_ref(x, her_feature, params, **conv_kw))

    # f32 matmuls, one image per grid step (grid=(2,) keeps both v7x TCs busy).
    out = jax.block_until_ready(
        her_guided_self_attention(x, her_feature, params, **conv_kw))
    assert out.shape == (B, C_OUT, H, W), out.shape
    assert jnp.allclose(out, ref, atol=5e-3, rtol=5e-3), \
        f"f32 max abs err {float(jnp.max(jnp.abs(out - ref)))}"

    # bf16 MXU operands (f32 accumulation / f32 softmax) -- v6e/v7x review item.
    out_bf16 = jax.block_until_ready(
        her_guided_self_attention(x, her_feature, params,
                                  use_bf16_matmul=True, **conv_kw))
    assert jnp.allclose(out_bf16, ref, atol=8e-2, rtol=8e-2), \
        f"bf16 max abs err {float(jnp.max(jnp.abs(out_bf16 - ref)))}"

    # Batch packing (2 images / grid step) -- v5e/v6e step-overhead review item.
    out_packed = jax.block_until_ready(
        her_guided_self_attention(x, her_feature, params,
                                  batch_tile=2, **conv_kw))
    assert jnp.allclose(out_packed, ref, atol=5e-3, rtol=5e-3), \
        f"packed max abs err {float(jnp.max(jnp.abs(out_packed - ref)))}"

    print("KERNEL_OK")
</pallas_src>

<mosaic_0001>
module attributes {stable_mosaic.version = 11 : i64} {
  func.func @her_attention_kernel(%arg0: i32, %arg1: memref<1x73x256xf32, #tpu.memory_space<vmem>>, %arg2: memref<24x73xf32, #tpu.memory_space<vmem>>, %arg3: memref<1x8x256xf32, #tpu.memory_space<vmem>>) attributes {dimension_semantics = [#tpu.dimension_semantics<parallel>], iteration_bounds = array<i64: 2>, scalar_prefetch = 0 : i64, scratch_operands = 0 : i64, tpu.core_type = #tpu.core_type<tc>, window_params = [{transform_indices = @transform_0, window_bounds = array<i64: 1, 73, 256>}, {pipeline_mode = #tpu.pipeline_mode<synchronous>, transform_indices = @transform_1, window_bounds = array<i64: 24, 73>}, {transform_indices = @transform_2, window_bounds = array<i64: 1, 8, 256>}]} {
    %c0 = arith.constant 0 : index
    %c0_0 = arith.constant 0 : index
    %0 = vector.load %arg2[%c0, %c0_0] : memref<24x73xf32, #tpu.memory_space<vmem>>, vector<24x73xf32>
    %c0_1 = arith.constant 0 : index
    %c0_2 = arith.constant 0 : index
    %c0_3 = arith.constant 0 : index
    %1 = vector.load %arg1[%c0_1, %c0_2, %c0_3] : memref<1x73x256xf32, #tpu.memory_space<vmem>>, vector<1x73x256xf32>
    %2 = vector.shape_cast %1 : vector<1x73x256xf32> to vector<73x256xf32>
    %cst = arith.constant dense<0.000000e+00> : vector<24x256xf32>
    %3 = tpu.matmul %0, %2, %cst {dimension_numbers = #tpu.dot_dimension_numbers<[1], [0], [0], [1], [0, 0, 1, 1], [], []>} : vector<24x73xf32>, vector<73x256xf32>, vector<24x256xf32> -> vector<24x256xf32>
    %4 = vector.shape_cast %3 : vector<24x256xf32> to vector<24x16x16xf32>
    %5 = vector.extract_strided_slice %4 {offsets = [0, 0, 0], sizes = [8, 16, 16], strides = [1, 1, 1]} : vector<24x16x16xf32> to vector<8x16x16xf32>
    %6 = vector.extract_strided_slice %4 {offsets = [8, 0, 0], sizes = [8, 16, 16], strides = [1, 1, 1]} : vector<24x16x16xf32> to vector<8x16x16xf32>
    %7 = vector.extract_strided_slice %4 {offsets = [16, 0, 0], sizes = [8, 16, 16], strides = [1, 1, 1]} : vector<24x16x16xf32> to vector<8x16x16xf32>
    "tpu.trace_start"() <{level = 10 : i32, message = "chd,cjd->chj"}> : () -> ()
    %cst_4 = arith.constant dense<0.000000e+00> : vector<8x16x16xf32>
    %8 = tpu.matmul %5, %7, %cst_4 {dimension_numbers = #tpu.dot_dimension_numbers<[2], [2], [1], [1], [0, 0, 0, 1, 1, 1], [0], [0]>} : vector<8x16x16xf32>, vector<8x16x16xf32>, vector<8x16x16xf32> -> vector<8x16x16xf32>
    "tpu.trace_stop"() : () -> ()
    %cst_5 = arith.constant dense<0xFF800000> : vector<8x16xf32>
    %9 = vector.multi_reduction <maximumf>, %8, %cst_5 [2] : vector<8x16x16xf32> to vector<8x16xf32>
    %10 = vector.shape_cast %9 : vector<8x16xf32> to vector<8x16x1xf32>
    %11 = vector.broadcast %10 : vector<8x16x1xf32> to vector<8x16x16xf32>
    %12 = arith.subf %8, %11 : vector<8x16x16xf32>
    %13 = math.exp %12 : vector<8x16x16xf32>
    %cst_6 = arith.constant dense<0.000000e+00> : vector<8x16xf32>
    %14 = vector.multi_reduction <add>, %13, %cst_6 [2] : vector<8x16x16xf32> to vector<8x16xf32>
    %15 = vector.shape_cast %14 : vector<8x16xf32> to vector<8x16x1xf32>
    %16 = tpu.reciprocal %15 {approx = true} : vector<8x16x1xf32> -> vector<8x16x1xf32>
    %17 = arith.mulf %15, %16 : vector<8x16x1xf32>
    %cst_7 = arith.constant 2.000000e+00 : f32
    %18 = vector.broadcast %cst_7 : f32 to vector<8x16x1xf32>
    %19 = arith.subf %18, %17 : vector<8x16x1xf32>
    %20 = arith.mulf %16, %19 : vector<8x16x1xf32>
    %21 = vector.broadcast %20 : vector<8x16x1xf32> to vector<8x16x16xf32>
    %22 = arith.mulf %13, %21 : vector<8x16x16xf32>
    "tpu.trace_start"() <{level = 10 : i32, message = "chj,cjd->chd"}> : () -> ()
    %cst_8 = arith.constant dense<0.000000e+00> : vector<8x16x16xf32>
    %23 = tpu.matmul %22, %6, %cst_8 {dimension_numbers = #tpu.dot_dimension_numbers<[2], [1], [1], [2], [0, 0, 0, 1, 1, 2], [0], [0]>} : vector<8x16x16xf32>, vector<8x16x16xf32>, vector<8x16x16xf32> -> vector<8x16x16xf32>
    "tpu.trace_stop"() : () -> ()
    %24 = vector.shape_cast %23 : vector<8x16x16xf32> to vector<1x8x256xf32>
    %c0_9 = arith.constant 0 : index
    %c0_10 = arith.constant 0 : index
    %c0_11 = arith.constant 0 : index
    %25 = vector.load %arg3[%c0_9, %c0_10, %c0_11] : memref<1x8x256xf32, #tpu.memory_space<vmem>>, vector<1x8x256xf32>
    tpu.vector_store %arg3[%c0_9, %c0_10, %c0_11], %24 {strides = array<i32>} : memref<1x8x256xf32, #tpu.memory_space<vmem>>, vector<1x8x256xf32>,
    return
  }
  func.func @transform_0(%arg0: i32) -> (i32, i32, i32) {
    %c0_i32 = arith.constant 0 : i32
    %c0_i32_0 = arith.constant 0 : i32
    %c0_i32_1 = arith.constant 0 : i32
    return %arg0, %c0_i32, %c0_i32_0 : i32, i32, i32
  }
  func.func @transform_1(%arg0: i32) -> (i32, i32) {
    %c0_i32 = arith.constant 0 : i32
    %c0_i32_0 = arith.constant 0 : i32
    %c0_i32_1 = arith.constant 0 : i32
    return %c0_i32, %c0_i32_0 : i32, i32
  }
  func.func @transform_2(%arg0: i32) -> (i32, i32, i32) {
    %c0_i32 = arith.constant 0 : i32
    %c0_i32_0 = arith.constant 0 : i32
    %c0_i32_1 = arith.constant 0 : i32
    return %arg0, %c0_i32, %c0_i32_0 : i32, i32, i32
  }
}

</mosaic_0001>

<llo_original>
// kernel: tpu_custom_call.1
$region0: #{tpu_custom_call.1}
  #allocation0 [shape = 'u32[]', space=smem, size = 0x4, offset = 0x4, fixed_abs, tag = 'smem constant byte address 0x4 - core index']
  #allocation1 [shape = 'u32[144,128]{1,0:T(1,128)}', space=vmem, size = 0x12000, scoped, tag = 'internal scratch']
  %s0 = inlined_call_operand.vmem [shape: f32[2,73,256], index: 0, kind: input, shape index: {}]
  %s1 = inlined_call_operand.vmem [shape: f32[24,73], index: 1, kind: input, shape index: {}]
  %s2 = inlined_call_operand.hbm [shape: f32[2,8,256], index: 2, kind: output, shape index: {}]
  %s3 = sld [smem:[#allocation0]]
  $region41: #{tpu_custom_call.1} parent=0
    _
  %s5 = ssub.s32 1, %s3
  %s6 = scalar_select 0, %s5, %s3
  $region1: #{tpu_custom_call.1} parent=0
    #allocation2 [shape = 'u8[16384]{0}', space=vmem, size = 0x4000, scoped, tag = 'output window, operand 0']
    #allocation3 [shape = 's32[2]{0}', space=sflag, size = 0x8, scoped, tag = 'scoped memory for tpu_custom_call.1']
    %7 = vsyncpa [#allocation3], 0
    %s8 = scalar_lea.sflag [#allocation3], 1
    %9 = vsyncpa %s8, 0
    loop: start=0, step=1, limit=4
    $region2: #{tpu_custom_call.1} parent=1 // loop_pre_header
      _
    $region3: #{tpu_custom_call.1} parent=1 // loop_header
      %s11 = sphi 0, %s15
      %p12 = scmp.ge.s32.totalorder %s11, 4
      %s21 = sphi 0, %s23
      %s24 = sphi 0, %s21
      %s25 = sphi 0, %s24
      %s41 = sphi 0, %s25
      %s45 = sphi 0, %s45
      %s47 = sphi 0, %s45
      %s48 = sphi 0, %s47
      %s62 = sphi 0, %s48
      %s68 = sphi 0, %s70
      %s71 = sphi 0, %s68
      %s72 = sphi 0, %s71
      %s88 = sphi 0, %s72
    $region4: #{tpu_custom_call.1} parent=1 // loop_header_branch
      %14 = sbr.rel (%p12) target = $region8
    $region5: #{tpu_custom_call.1} parent=1 // loop_body
      %s16 = ssub.s32 %s11, 1
      %s17 = ssub.s32 %s11, 2
      %s18 = sadd.s32 %s11, 1
      %s19 = ssub.s32 %s11, %s18
      %p20 = scmp.eq.s32.totalorder %s19, 0
      %s22 = sadd.s32 %s21, 1
      %s23 = scalar_select %p20, %s21, %s22
      %p26 = pneg %p20
      %p27 = scmp.eq.s32.totalorder %s11, 1
      %p28 = por %p26, %p27
      %p29 = scmp.ne.s32.totalorder %s21, %s24
      %p30 = scmp.eq.s32.totalorder %s11, 0
      %p31 = por %p29, %p30
      %p32 = scmp.ne.s32.totalorder %s21, %s24
      %p33 = scmp.eq.s32.totalorder %s16, 1
      %p34 = por %p32, %p33
      %p35 = scmp.ne.s32.totalorder %s24, %s25
      %p36 = scmp.eq.s32.totalorder %s16, 0
      %p37 = por %p35, %p36
      %p38 = scmp.ne.s32.totalorder %s24, %s25
      %p39 = scmp.eq.s32.totalorder %s17, 1
      %p40 = por %p38, %p39
      %p42 = scmp.ne.s32.totalorder %s25, %s41
      %p43 = scmp.eq.s32.totalorder %s17, 0
      %p44 = por %p42, %p43
      %s46 = sadd.s32 %s45, 1
      %p49 = scmp.eq.s32.totalorder %s11, 1
      %p50 = scmp.ne.s32.totalorder %s45, %s47
      %p51 = scmp.eq.s32.totalorder %s11, 0
      %p52 = por %p50, %p51
      %p53 = scmp.ne.s32.totalorder %s45, %s47
      %p54 = scmp.eq.s32.totalorder %s16, 1
      %p55 = por %p53, %p54
      %p56 = scmp.ne.s32.totalorder %s47, %s48
      %p57 = scmp.eq.s32.totalorder %s16, 0
      %p58 = por %p56, %p57
      %p59 = scmp.ne.s32.totalorder %s47, %s48
      %p60 = scmp.eq.s32.totalorder %s17, 1
      %p61 = por %p59, %p60
      %p63 = scmp.ne.s32.totalorder %s48, %s62
      %p64 = scmp.eq.s32.totalorder %s17, 0
      %p65 = por %p63, %p64
      %s66 = ssub.s32 %s11, %s18
      %p67 = scmp.eq.s32.totalorder %s66, 0
      %s69 = sadd.s32 %s68, 1
      %s70 = scalar_select %p67, %s68, %s69
      %p73 = pneg %p67
      %p74 = scmp.eq.s32.totalorder %s11, 1
      %p75 = por %p73, %p74
      %p76 = scmp.ne.s32.totalorder %s68, %s71
      %p77 = scmp.eq.s32.totalorder %s11, 0
      %p78 = por %p76, %p77
      %p79 = scmp.ne.s32.totalorder %s68, %s71
      %p80 = scmp.eq.s32.totalorder %s16, 1
      %p81 = por %p79, %p80
      %p82 = scmp.ne.s32.totalorder %s71, %s72
      %p83 = scmp.eq.s32.totalorder %s16, 0
      %p84 = por %p82, %p83
      %p85 = scmp.ne.s32.totalorder %s71, %s72
      %p86 = scmp.eq.s32.totalorder %s17, 1
      %p87 = por %p85, %p86
      %p89 = scmp.ne.s32.totalorder %s72, %s88
      %p90 = scmp.eq.s32.totalorder %s17, 0
      %p91 = por %p89, %p90
      %p92 = scmp.le.s32.totalorder 1, %s11
      %p93 = scmp.lt.s32.totalorder %s11, 3
      %p94 = pnand %p92, %p93
      %p95 = pneg %p94
      // Predicated region
      $region9: #{tpu_custom_call.1} parent=5 // pred_check
        _
      $region10: #{tpu_custom_call.1} parent=5 // pred_check_branch
        %97 = sbr.rel (%p94) target = $region12
      $region11: #{tpu_custom_call.1} parent=5 // pred_region
        %s98 = ssub.s32 %s11, 1
        // Predicated region
        $region13: #{tpu_custom_call.1} parent=11 // pred_check
          %p99 = pneg %p58
        $region14: #{tpu_custom_call.1} parent=11 // pred_check_branch
          %101 = sbr.rel (%p99) target = $region16
        $region15: #{tpu_custom_call.1} parent=11 // pred_region
          _
        $region16: #{tpu_custom_call.1} parent=11 // pred_fallthru
          _
      $region12: #{tpu_custom_call.1} parent=5 // pred_fallthru
        _
      %p102 = scmp.lt.s32.totalorder %s11, 2
      // Predicated region
      $region17: #{tpu_custom_call.1} parent=5 // pred_check
        %p103 = pneg %p102
      $region18: #{tpu_custom_call.1} parent=5 // pred_check_branch
        %105 = sbr.rel (%p103) target = $region20
      $region19: #{tpu_custom_call.1} parent=5 // pred_region
        // Predicated region
        $region21: #{tpu_custom_call.1} parent=19 // pred_check
          %p106 = pneg %p31
        $region22: #{tpu_custom_call.1} parent=19 // pred_check_branch
          %108 = sbr.rel (%p106) target = $region24
        $region23: #{tpu_custom_call.1} parent=19 // pred_region
          %p109 = scmp.lt.s32.totalorder %s11, 1
          %s110 = scalar_select %p109, %s11, 1
          %s111 = smul.addr %s110, 20
          %s112 = smul.addr %s111, 8
          %s113 = scalar_lea.vmem %s0, %s112
        $region24: #{tpu_custom_call.1} parent=19 // pred_fallthru
          _
      $region20: #{tpu_custom_call.1} parent=5 // pred_fallthru
        _
      %p114 = scmp.le.s32.totalorder 1, %s11
      %p115 = scmp.lt.s32.totalorder %s11, 3
      %p116 = pnand %p114, %p115
      %p117 = pneg %p116
      // Predicated region
      $region25: #{tpu_custom_call.1} parent=5 // pred_check
        _
      $region26: #{tpu_custom_call.1} parent=5 // pred_check_branch
        %119 = sbr.rel (%p116) target = $region28
      $region27: #{tpu_custom_call.1} parent=5 // pred_region
        %s120 = ssub.s32 %s11, 1
        %p121 = scmp.lt.s32.totalorder %s16, 1
        %s122 = scalar_select %p121, %s16, 1
        %s123 = smul.addr %s122, 20
        %s124 = smul.addr %s123, 8
        %s125 = scalar_lea.vmem %s0, %s124
        %p126 = pneg %p37
        %p127 = pneg %p34
        %p128 = pneg %p58
        %p129 = pneg %p55
        %p130 = pneg %p84
        %p131 = pneg %p81
        %s132 = sand.u32 %s71, 1
        %s133 = scalar_lea.sflag [#allocation3], %s132
        %s134 = sand.u32 %s71, 1
        %s135 = smul.addr %s134, 16
        %s136 = scalar_lea.vmem [#allocation2], %s135
        %p137 = scmp.lt.s32.totalorder %s16, 1
        %s138 = scalar_select %p137, %s16, 1
        %s139 = smul.addr %s138, 20
        %s140 = smul.addr %s139, 8
        %s141 = scalar_lea.vmem %s0, %s140
        %v142 = vld [vmem:[%s1] sm:$0xff]
        %v143 = vld [vmem:[%s1 + $0x8] sm:$0xff]
        %v144 = vld [vmem:[%s1 + $0x10] sm:$0xff]
        %v145 = vld [vmem:[%s141] sm:$0xff]
        %v146 = vld [vmem:[%s141 + $0x8] sm:$0xff]
        %v147 = vld [vmem:[%s141 + $0x10] sm:$0xff]
        %v148 = vld [vmem:[%s141 + $0x18] sm:$0xff]
        %v149 = vld [vmem:[%s141 + $0x20] sm:$0xff]
        %v150 = vld [vmem:[%s141 + $0x28] sm:$0xff]
        %v151 = vld [vmem:[%s141 + $0x30] sm:$0xff]
        %v152 = vld [vmem:[%s141 + $0x38] sm:$0xff]
        %v153 = vld [vmem:[%s141 + $0x40] sm:$0xff]
        %v154 = vld [vmem:[%s141 + $0x48] sm:$0xff]
        %v155 = vld [vmem:[%s141 + $0x50] sm:$0xff]
        %v156 = vld [vmem:[%s141 + $0x58] sm:$0xff]
        %v157 = vld [vmem:[%s141 + $0x60] sm:$0xff]
        %v158 = vld [vmem:[%s141 + $0x68] sm:$0xff]
        %v159 = vld [vmem:[%s141 + $0x70] sm:$0xff]
        %v160 = vld [vmem:[%s141 + $0x78] sm:$0xff]
        %v161 = vld [vmem:[%s141 + $0x80] sm:$0xff]
        %v162 = vld [vmem:[%s141 + $0x88] sm:$0xff]
        %v163 = vld [vmem:[%s141 + $0x90] sm:$0x1]
        %v164 = vld [vmem:[%s141 + $0x98] sm:$0x1]
        %vm165 = vcmask 596992
        %v167 = vsel %vm165, %v142, 0
        %v170 = vsel %vm165, %v143, 0
        %v173 = vsel %vm165, %v144, 0
        %vm175 = vcmask 1040384
        %v177 = vsel %vm175, %v163, 0
        %v180 = vsel %vm175, %v164, 0
        %182 = vmatprep.subr.mxu0 0.0
        %183 = vmatpush1.msra.mxu0 0.0
        %184 = vmatprep.subr.mxu0 0.0
        %185 = vmatpush1.msra.mxu0 0.0
        %186 = vmatprep.subr.mxu0 0.0
        %187 = vmatpush1.msra.mxu0 0.0
        %188 = vmatprep.subr.mxu0 0.0
        %189 = vmatpush1.msra.mxu0 0.0
        %190 = vmatprep.subr.mxu0 0.0
        %191 = vmatpush1.msra.mxu0 0.0
        %192 = vmatprep.subr.mxu0 0.0
        %193 = vmatpush1.msra.mxu0 0.0
        %194 = vmatprep.subr.mxu0 %v180
        %195 = vmatpush1.msra.mxu0 %v177
        %196 = vmatprep.subr.mxu0 %v162
        %197 = vmatpush1.msra.mxu0 %v161
        %198 = vmatprep.subr.mxu0 %v160
        %199 = vmatpush1.msra.mxu0 %v159
        %200 = vmatprep.subr.mxu0 %v158
        %201 = vmatpush1.msra.mxu0 %v157
        %202 = vmatprep.subr.mxu0 %v156
        %203 = vmatpush1.msra.mxu0 %v155
        %204 = vmatprep.subr.mxu0 %v154
        %205 = vmatpush1.msra.mxu0 %v153
        %206 = vmatprep.subr.mxu0 %v152
        %207 = vmatpush1.msra.mxu0 %v151
        %208 = vmatprep.subr.mxu0 %v150
        %209 = vmatpush1.msra.mxu0 %v149
        %210 = vmatprep.subr.mxu0 %v148
        %211 = vmatpush1.msra.mxu0 %v147
        %212 = vmatprep.subr.mxu0 %v146
        %213 = vmatpush1.msra.mxu0 %v145
        %214 = vmatprep.subr.mxu0 0.0
        %215 = vmatpush2.msra.mxu0 0.0
        %216 = vmatprep.subr.mxu0 0.0
        %217 = vmatpush2.msra.mxu0 0.0
        %218 = vmatprep.subr.mxu0 0.0
        %219 = vmatpush2.msra.mxu0 0.0
        %220 = vmatprep.subr.mxu0 0.0
        %221 = vmatpush2.msra.mxu0 0.0
        %222 = vmatprep.subr.mxu0 0.0
        %223 = vmatpush2.msra.mxu0 0.0
        %224 = vmatprep.subr.mxu0 0.0
        %225 = vmatpush2.msra.mxu0 0.0
        %226 = vmatprep.subr.mxu0 0.0
        %227 = vmatpush2.msra.mxu0 0.0
        %228 = vmatprep.subr.mxu0 0.0
        %229 = vmatpush2.msra.mxu0 0.0
        %230 = vmatprep.subr.mxu0 0.0
        %231 = vmatpush2.msra.mxu0 0.0
        %232 = vmatprep.subr.mxu0 0.0
        %233 = vmatpush2.msra.mxu0 0.0
        %234 = vmatprep.subr.mxu0 0.0
        %235 = vmatpush2.msra.mxu0 0.0
        %236 = vmatprep.subr.mxu0 0.0
        %237 = vmatpush2.msra.mxu0 0.0
        %238 = vmatprep.subr.mxu0 0.0
        %239 = vmatpush2.msra.mxu0 0.0
        %240 = vmatprep.subr.mxu0 0.0
        %241 = vmatpush2.msra.mxu0 0.0
        %242 = vmatprep.subr.mxu0 0.0
        %243 = vmatpush2.msra.mxu0 0.0
        %244 = vmatprep.subr.mxu0 0.0
        %245 = vmatpush2.msra.mxu0 0.0
        %246 = vmatprep.mubr.f32.mxu0 0.0
        %247 = vmatmul.mubr.f32.gmra.mxu0 %v167
        %v248 = vpop.f32.mrf.mxu0
        %v249 = vadd.f32 0.0, %v248
        %v250 = vpop.f32.mrf.mxu0
        %v251 = vadd.f32 0.0, %v250
        %252 = vmatprep.mubr.f32.mxu0 0.0
        %253 = vmatmul.mubr.f32.gmra.mxu0 %v170
        %v254 = vpop.f32.mrf.mxu0
        %v255 = vadd.f32 0.0, %v254
        %v256 = vpop.f32.mrf.mxu0
        %v257 = vadd.f32 0.0, %v256
        %258 = vmatprep.mubr.f32.mxu0 0.0
        %259 = vmatmul.mubr.f32.gmra.mxu0 %v173
        %v260 = vpop.f32.mrf.mxu0
        %v261 = vadd.f32 0.0, %v260
        %v262 = vpop.f32.mrf.mxu0
        %v263 = vadd.f32 0.0, %v262
        %264 = vdwg.mxu0
        %268 = vrot.lane.b32.xlu0 %v249, 112
        %v269 = vpop.permute.xlu0 %268
        %270 = vrot.lane.b32.xlu0 %v255, 112
        %v271 = vpop.permute.xlu0 %270
        %272 = vrot.lane.b32.xlu0 %v261, 112
        %v273 = vpop.permute.xlu0 %272
        %277 = vrot.lane.b32.xlu0 %v249, 96
        %v278 = vpop.permute.xlu0 %277
        %279 = vrot.lane.b32.xlu0 %v255, 96
        %v280 = vpop.permute.xlu0 %279
        %281 = vrot.lane.b32.xlu0 %v261, 96
        %v282 = vpop.permute.xlu0 %281
        %286 = vrot.lane.b32.xlu0 %v249, 80
        %v287 = vpop.permute.xlu0 %286
        %288 = vrot.lane.b32.xlu0 %v255, 80
        %v289 = vpop.permute.xlu0 %288
        %290 = vrot.lane.b32.xlu0 %v261, 80
        %v291 = vpop.permute.xlu0 %290
        %295 = vrot.lane.b32.xlu0 %v249, 64
        %v296 = vpop.permute.xlu0 %295
        %297 = vrot.lane.b32.xlu0 %v255, 64
        %v298 = vpop.permute.xlu0 %297
        %299 = vrot.lane.b32.xlu0 %v261, 64
        %v300 = vpop.permute.xlu0 %299
        %304 = vrot.lane.b32.xlu0 %v249, 48
        %v305 = vpop.permute.xlu0 %304
        %306 = vrot.lane.b32.xlu0 %v255, 48
        %v307 = vpop.permute.xlu0 %306
        %308 = vrot.lane.b32.xlu0 %v261, 48
        %v309 = vpop.permute.xlu0 %308
        %313 = vrot.lane.b32.xlu0 %v249, 32
        %v314 = vpop.permute.xlu0 %313
        %315 = vrot.lane.b32.xlu0 %v255, 32
        %v316 = vpop.permute.xlu0 %315
        %317 = vrot.lane.b32.xlu0 %v261, 32
        %v318 = vpop.permute.xlu0 %317
        %322 = vrot.lane.b32.xlu0 %v249, 16
        %v323 = vpop.permute.xlu0 %322
        %324 = vrot.lane.b32.xlu0 %v255, 16
        %v325 = vpop.permute.xlu0 %324
        %326 = vrot.lane.b32.xlu0 %v261, 16
        %v327 = vpop.permute.xlu0 %326
        %334 = vrot.lane.b32.xlu0 %v251, 112
        %v335 = vpop.permute.xlu0 %334
        %336 = vrot.lane.b32.xlu0 %v257, 112
        %v337 = vpop.permute.xlu0 %336
        %338 = vrot.lane.b32.xlu0 %v263, 112
        %v339 = vpop.permute.xlu0 %338
        %343 = vrot.lane.b32.xlu0 %v251, 96
        %v344 = vpop.permute.xlu0 %343
        %345 = vrot.lane.b32.xlu0 %v257, 96
        %v346 = vpop.permute.xlu0 %345
        %347 = vrot.lane.b32.xlu0 %v263, 96
        %v348 = vpop.permute.xlu0 %347
        %352 = vrot.lane.b32.xlu0 %v251, 80
        %v353 = vpop.permute.xlu0 %352
        %354 = vrot.lane.b32.xlu0 %v257, 80
        %v355 = vpop.permute.xlu0 %354
        %356 = vrot.lane.b32.xlu0 %v263, 80
        %v357 = vpop.permute.xlu0 %356
        %361 = vrot.lane.b32.xlu0 %v251, 64
        %v362 = vpop.permute.xlu0 %361
        %363 = vrot.lane.b32.xlu0 %v257, 64
        %v364 = vpop.permute.xlu0 %363
        %365 = vrot.lane.b32.xlu0 %v263, 64
        %v366 = vpop.permute.xlu0 %365
        %370 = vrot.lane.b32.xlu0 %v251, 48
        %v371 = vpop.permute.xlu0 %370
        %372 = vrot.lane.b32.xlu0 %v257, 48
        %v373 = vpop.permute.xlu0 %372
        %374 = vrot.lane.b32.xlu0 %v263, 48
        %v375 = vpop.permute.xlu0 %374
        %379 = vrot.lane.b32.xlu0 %v251, 32
        %v380 = vpop.permute.xlu0 %379
        %381 = vrot.lane.b32.xlu0 %v257, 32
        %v382 = vpop.permute.xlu0 %381
        %383 = vrot.lane.b32.xlu0 %v263, 32
        %v384 = vpop.permute.xlu0 %383
        %388 = vrot.lane.b32.xlu0 %v251, 16
        %v389 = vpop.permute.xlu0 %388
        %390 = vrot.lane.b32.xlu0 %v257, 16
        %v391 = vpop.permute.xlu0 %390
        %392 = vrot.lane.b32.xlu0 %v263, 16
        %v393 = vpop.permute.xlu0 %392
        %v397 = vcombine.low %v249, %v278
        %v398 = vcombine.high %v249, %v278
        %v400 = vunpack.c.l.s4 1983009808
        %v401 = vunpack.c.0.s8 %v400
        %v402 = vlaneseq
        %v403 = vshrl.u32 %v402, 7
        %v404 = vsub.s32 %v401, %v403
        %v405 = vrot.slane %v397, %v404
        %v407 = vunpack.c.l.s4 1983009808
        %v408 = vunpack.c.0.s8 %v407
        %v409 = vlaneseq
        %v410 = vshrl.u32 %v409, 7
        %v411 = vsub.s32 %v408, %v410
        %v412 = vrot.slane %v398, %v411
        %v413 = vcombine.low %v269, %v287
        %v414 = vcombine.high %v269, %v287
        %v416 = vunpack.c.l.s4 1983009808
        %v417 = vunpack.c.0.s8 %v416
        %v418 = vlaneseq
        %v419 = vshrl.u32 %v418, 7
        %v420 = vsub.s32 %v417, %v419
        %v421 = vrot.slane %v413, %v420
        %v423 = vunpack.c.l.s4 1983009808
        %v424 = vunpack.c.0.s8 %v423
        %v425 = vlaneseq
        %v426 = vshrl.u32 %v425, 7
        %v427 = vsub.s32 %v424, %v426
        %v428 = vrot.slane %v414, %v427
        %v429 = vcombine.low %v296, %v314
        %v430 = vcombine.high %v296, %v314
        %v432 = vunpack.c.l.s4 1983009808
        %v433 = vunpack.c.0.s8 %v432
        %v434 = vlaneseq
        %v435 = vshrl.u32 %v434, 7
        %v436 = vsub.s32 %v433, %v435
        %v437 = vrot.slane %v429, %v436
        %v439 = vunpack.c.l.s4 1983009808
        %v440 = vunpack.c.0.s8 %v439
        %v441 = vlaneseq
        %v442 = vshrl.u32 %v441, 7
        %v443 = vsub.s32 %v440, %v442
        %v444 = vrot.slane %v430, %v443
        %v445 = vcombine.low %v305, %v323
        %v446 = vcombine.high %v305, %v323
        %v448 = vunpack.c.l.s4 1983009808
        %v449 = vunpack.c.0.s8 %v448
        %v450 = vlaneseq
        %v451 = vshrl.u32 %v450, 7
        %v452 = vsub.s32 %v449, %v451
        %v453 = vrot.slane %v445, %v452
        %v455 = vunpack.c.l.s4 1983009808
        %v456 = vunpack.c.0.s8 %v455
        %v457 = vlaneseq
        %v458 = vshrl.u32 %v457, 7
        %v459 = vsub.s32 %v456, %v458
        %v460 = vrot.slane %v446, %v459
        %v461 = vcombine.low %v405, %v421
        %v462 = vcombine.high %v405, %v421
        %v464 = vunpack.c.l.s4 1934713408
        %v465 = vunpack.c.0.s8 %v464
        %v466 = vlaneseq
        %v467 = vshrl.u32 %v466, 7
        %v468 = vsub.s32 %v465, %v467
        %v469 = vrot.slane %v461, %v468
        %v471 = vunpack.c.l.s4 1934713408
        %v472 = vunpack.c.0.s8 %v471
        %v473 = vlaneseq
        %v474 = vshrl.u32 %v473, 7
        %v475 = vsub.s32 %v472, %v474
        %v476 = vrot.slane %v462, %v475
        %v477 = vcombine.low %v412, %v428
        %v478 = vcombine.high %v412, %v428
        %v480 = vunpack.c.l.s4 1934713408
        %v481 = vunpack.c.0.s8 %v480
        %v482 = vlaneseq
        %v483 = vshrl.u32 %v482, 7
        %v484 = vsub.s32 %v481, %v483
        %v485 = vrot.slane %v477, %v484
        %v487 = vunpack.c.l.s4 1934713408
        %v488 = vunpack.c.0.s8 %v487
        %v489 = vlaneseq
        %v490 = vshrl.u32 %v489, 7
        %v491 = vsub.s32 %v488, %v490
        %v492 = vrot.slane %v478, %v491
        %v493 = vcombine.low %v437, %v453
        %v494 = vcombine.high %v437, %v453
        %v496 = vunpack.c.l.s4 1934713408
        %v497 = vunpack.c.0.s8 %v496
        %v498 = vlaneseq
        %v499 = vshrl.u32 %v498, 7
        %v500 = vsub.s32 %v497, %v499
        %v501 = vrot.slane %v493, %v500
        %v503 = vunpack.c.l.s4 1934713408
        %v504 = vunpack.c.0.s8 %v503
        %v505 = vlaneseq
        %v506 = vshrl.u32 %v505, 7
        %v507 = vsub.s32 %v504, %v506
        %v508 = vrot.slane %v494, %v507
        %v509 = vcombine.low %v444, %v460
        %v510 = vcombine.high %v444, %v460
        %v512 = vunpack.c.l.s4 1934713408
        %v513 = vunpack.c.0.s8 %v512
        %v514 = vlaneseq
        %v515 = vshrl.u32 %v514, 7
        %v516 = vsub.s32 %v513, %v515
        %v517 = vrot.slane %v509, %v516
        %v519 = vunpack.c.l.s4 1934713408
        %v520 = vunpack.c.0.s8 %v519
        %v521 = vlaneseq
        %v522 = vshrl.u32 %v521, 7
        %v523 = vsub.s32 %v520, %v522
        %v524 = vrot.slane %v510, %v523
        %v525 = vcombine.low %v469, %v501
        %v526 = vcombine.high %v469, %v501
        %v527 = vcombine.low %v476, %v508
        %v528 = vcombine.high %v476, %v508
        %v529 = vcombine.low %v485, %v517
        %v530 = vcombine.high %v485, %v517
        %v531 = vcombine.low %v492, %v524
        %v532 = vcombine.high %v492, %v524
        %v533 = vcombine.low %v251, %v344
        %v534 = vcombine.high %v251, %v344
        %v536 = vunpack.c.l.s4 1983009808
        %v537 = vunpack.c.0.s8 %v536
        %v538 = vlaneseq
        %v539 = vshrl.u32 %v538, 7
        %v540 = vsub.s32 %v537, %v539
        %v541 = vrot.slane %v533, %v540
        %v543 = vunpack.c.l.s4 1983009808
        %v544 = vunpack.c.0.s8 %v543
        %v545 = vlaneseq
        %v546 = vshrl.u32 %v545, 7
        %v547 = vsub.s32 %v544, %v546
        %v548 = vrot.slane %v534, %v547
        %v549 = vcombine.low %v335, %v353
        %v550 = vcombine.high %v335, %v353
        %v552 = vunpack.c.l.s4 1983009808
        %v553 = vunpack.c.0.s8 %v552
        %v554 = vlaneseq
        %v555 = vshrl.u32 %v554, 7
        %v556 = vsub.s32 %v553, %v555
        %v557 = vrot.slane %v549, %v556
        %v559 = vunpack.c.l.s4 1983009808
        %v560 = vunpack.c.0.s8 %v559
        %v561 = vlaneseq
        %v562 = vshrl.u32 %v561, 7
        %v563 = vsub.s32 %v560, %v562
        %v564 = vrot.slane %v550, %v563
        %v565 = vcombine.low %v362, %v380
        %v566 = vcombine.high %v362, %v380
        %v568 = vunpack.c.l.s4 1983009808
        %v569 = vunpack.c.0.s8 %v568
        %v570 = vlaneseq
        %v571 = vshrl.u32 %v570, 7
        %v572 = vsub.s32 %v569, %v571
        %v573 = vrot.slane %v565, %v572
        %v575 = vunpack.c.l.s4 1983009808
        %v576 = vunpack.c.0.s8 %v575
        %v577 = vlaneseq
        %v578 = vshrl.u32 %v577, 7
        %v579 = vsub.s32 %v576, %v578
        %v580 = vrot.slane %v566, %v579
        %v581 = vcombine.low %v371, %v389
        %v582 = vcombine.high %v371, %v389
        %v584 = vunpack.c.l.s4 1983009808
        %v585 = vunpack.c.0.s8 %v584
        %v586 = vlaneseq
        %v587 = vshrl.u32 %v586, 7
        %v588 = vsub.s32 %v585, %v587
        %v589 = vrot.slane %v581, %v588
        %v591 = vunpack.c.l.s4 1983009808
        %v592 = vunpack.c.0.s8 %v591
        %v593 = vlaneseq
        %v594 = vshrl.u32 %v593, 7
        %v595 = vsub.s32 %v592, %v594
        %v596 = vrot.slane %v582, %v595
        %v597 = vcombine.low %v541, %v557
        %v598 = vcombine.high %v541, %v557
        %v600 = vunpack.c.l.s4 1934713408
        %v601 = vunpack.c.0.s8 %v600
        %v602 = vlaneseq
        %v603 = vshrl.u32 %v602, 7
        %v604 = vsub.s32 %v601, %v603
        %v605 = vrot.slane %v597, %v604
        %v607 = vunpack.c.l.s4 1934713408
        %v608 = vunpack.c.0.s8 %v607
        %v609 = vlaneseq
        %v610 = vshrl.u32 %v609, 7
        %v611 = vsub.s32 %v608, %v610
        %v612 = vrot.slane %v598, %v611
        %v613 = vcombine.low %v548, %v564
        %v614 = vcombine.high %v548, %v564
        %v616 = vunpack.c.l.s4 1934713408
        %v617 = vunpack.c.0.s8 %v616
        %v618 = vlaneseq
        %v619 = vshrl.u32 %v618, 7
        %v620 = vsub.s32 %v617, %v619
        %v621 = vrot.slane %v613, %v620
        %v623 = vunpack.c.l.s4 1934713408
        %v624 = vunpack.c.0.s8 %v623
        %v625 = vlaneseq
        %v626 = vshrl.u32 %v625, 7
        %v627 = vsub.s32 %v624, %v626
        %v628 = vrot.slane %v614, %v627
        %v629 = vcombine.low %v573, %v589
        %v630 = vcombine.high %v573, %v589
        %v632 = vunpack.c.l.s4 1934713408
        %v633 = vunpack.c.0.s8 %v632
        %v634 = vlaneseq
        %v635 = vshrl.u32 %v634, 7
        %v636 = vsub.s32 %v633, %v635
        %v637 = vrot.slane %v629, %v636
        %v639 = vunpack.c.l.s4 1934713408
        %v640 = vunpack.c.0.s8 %v639
        %v641 = vlaneseq
        %v642 = vshrl.u32 %v641, 7
        %v643 = vsub.s32 %v640, %v642
        %v644 = vrot.slane %v630, %v643
        %v645 = vcombine.low %v580, %v596
        %v646 = vcombine.high %v580, %v596
        %v648 = vunpack.c.l.s4 1934713408
        %v649 = vunpack.c.0.s8 %v648
        %v650 = vlaneseq
        %v651 = vshrl.u32 %v650, 7
        %v652 = vsub.s32 %v649, %v651
        %v653 = vrot.slane %v645, %v652
        %v655 = vunpack.c.l.s4 1934713408
        %v656 = vunpack.c.0.s8 %v655
        %v657 = vlaneseq
        %v658 = vshrl.u32 %v657, 7
        %v659 = vsub.s32 %v656, %v658
        %v660 = vrot.slane %v646, %v659
        %v661 = vcombine.low %v605, %v637
        %v662 = vcombine.high %v605, %v637
        %v663 = vcombine.low %v612, %v644
        %v664 = vcombine.high %v612, %v644
        %v665 = vcombine.low %v621, %v653
        %v666 = vcombine.high %v621, %v653
        %v667 = vcombine.low %v628, %v660
        %v668 = vcombine.high %v628, %v660
        %v669 = vcombine.low %v255, %v280
        %v670 = vcombine.high %v255, %v280
        %v672 = vunpack.c.l.s4 1983009808
        %v673 = vunpack.c.0.s8 %v672
        %v674 = vlaneseq
        %v675 = vshrl.u32 %v674, 7
        %v676 = vsub.s32 %v673, %v675
        %v677 = vrot.slane %v669, %v676
        %v679 = vunpack.c.l.s4 1983009808
        %v680 = vunpack.c.0.s8 %v679
        %v681 = vlaneseq
        %v682 = vshrl.u32 %v681, 7
        %v683 = vsub.s32 %v680, %v682
        %v684 = vrot.slane %v670, %v683
        %v685 = vcombine.low %v271, %v289
        %v686 = vcombine.high %v271, %v289
        %v688 = vunpack.c.l.s4 1983009808
        %v689 = vunpack.c.0.s8 %v688
        %v690 = vlaneseq
        %v691 = vshrl.u32 %v690, 7
        %v692 = vsub.s32 %v689, %v691
        %v693 = vrot.slane %v685, %v692
        %v695 = vunpack.c.l.s4 1983009808
        %v696 = vunpack.c.0.s8 %v695
        %v697 = vlaneseq
        %v698 = vshrl.u32 %v697, 7
        %v699 = vsub.s32 %v696, %v698
        %v700 = vrot.slane %v686, %v699
        %v701 = vcombine.low %v298, %v316
        %v702 = vcombine.high %v298, %v316
        %v704 = vunpack.c.l.s4 1983009808
        %v705 = vunpack.c.0.s8 %v704
        %v706 = vlaneseq
        %v707 = vshrl.u32 %v706, 7
        %v708 = vsub.s32 %v705, %v707
        %v709 = vrot.slane %v701, %v708
        %v711 = vunpack.c.l.s4 1983009808
        %v712 = vunpack.c.0.s8 %v711
        %v713 = vlaneseq
        %v714 = vshrl.u32 %v713, 7
        %v715 = vsub.s32 %v712, %v714
        %v716 = vrot.slane %v702, %v715
        %v717 = vcombine.low %v307, %v325
        %v718 = vcombine.high %v307, %v325
        %v720 = vunpack.c.l.s4 1983009808
        %v721 = vunpack.c.0.s8 %v720
        %v722 = vlaneseq
        %v723 = vshrl.u32 %v722, 7
        %v724 = vsub.s32 %v721, %v723
        %v725 = vrot.slane %v717, %v724
        %v727 = vunpack.c.l.s4 1983009808
        %v728 = vunpack.c.0.s8 %v727
        %v729 = vlaneseq
        %v730 = vshrl.u32 %v729, 7
        %v731 = vsub.s32 %v728, %v730
        %v732 = vrot.slane %v718, %v731
        %v733 = vcombine.low %v677, %v693
        %v734 = vcombine.high %v677, %v693
        %v736 = vunpack.c.l.s4 1934713408
        %v737 = vunpack.c.0.s8 %v736
        %v738 = vlaneseq
        %v739 = vshrl.u32 %v738, 7
        %v740 = vsub.s32 %v737, %v739
        %v741 = vrot.slane %v733, %v740
        %v743 = vunpack.c.l.s4 1934713408
        %v744 = vunpack.c.0.s8 %v743
        %v745 = vlaneseq
        %v746 = vshrl.u32 %v745, 7
        %v747 = vsub.s32 %v744, %v746
        %v748 = vrot.slane %v734, %v747
        %v749 = vcombine.low %v684, %v700
        %v750 = vcombine.high %v684, %v700
        %v752 = vunpack.c.l.s4 1934713408
        %v753 = vunpack.c.0.s8 %v752
        %v754 = vlaneseq
        %v755 = vshrl.u32 %v754, 7
        %v756 = vsub.s32 %v753, %v755
        %v757 = vrot.slane %v749, %v756
        %v759 = vunpack.c.l.s4 1934713408
        %v760 = vunpack.c.0.s8 %v759
        %v761 = vlaneseq
        %v762 = vshrl.u32 %v761, 7
        %v763 = vsub.s32 %v760, %v762
        %v764 = vrot.slane %v750, %v763
        %v765 = vcombine.low %v709, %v725
        %v766 = vcombine.high %v709, %v725
        %v768 = vunpack.c.l.s4 1934713408
        %v769 = vunpack.c.0.s8 %v768
        %v770 = vlaneseq
        %v771 = vshrl.u32 %v770, 7
        %v772 = vsub.s32 %v769, %v771
        %v773 = vrot.slane %v765, %v772
        %v775 = vunpack.c.l.s4 1934713408
        %v776 = vunpack.c.0.s8 %v775
        %v777 = vlaneseq
        %v778 = vshrl.u32 %v777, 7
        %v779 = vsub.s32 %v776, %v778
        %v780 = vrot.slane %v766, %v779
        %v781 = vcombine.low %v716, %v732
        %v782 = vcombine.high %v716, %v732
        %v784 = vunpack.c.l.s4 1934713408
        %v785 = vunpack.c.0.s8 %v784
        %v786 = vlaneseq
        %v787 = vshrl.u32 %v786, 7
        %v788 = vsub.s32 %v785, %v787
        %v789 = vrot.slane %v781, %v788
        %v791 = vunpack.c.l.s4 1934713408
        %v792 = vunpack.c.0.s8 %v791
        %v793 = vlaneseq
        %v794 = vshrl.u32 %v793, 7
        %v795 = vsub.s32 %v792, %v794
        %v796 = vrot.slane %v782, %v795
        %v797 = vcombine.low %v741, %v773
        %v798 = vcombine.high %v741, %v773
        %v799 = vcombine.low %v748, %v780
        %v800 = vcombine.high %v748, %v780
        %v801 = vcombine.low %v757, %v789
        %v802 = vcombine.high %v757, %v789
        %v803 = vcombine.low %v764, %v796
        %v804 = vcombine.high %v764, %v796
        %v805 = vcombine.low %v257, %v346
        %v806 = vcombine.high %v257, %v346
        %v808 = vunpack.c.l.s4 1983009808
        %v809 = vunpack.c.0.s8 %v808
        %v810 = vlaneseq
        %v811 = vshrl.u32 %v810, 7
        %v812 = vsub.s32 %v809, %v811
        %v813 = vrot.slane %v805, %v812
        %v815 = vunpack.c.l.s4 1983009808
        %v816 = vunpack.c.0.s8 %v815
        %v817 = vlaneseq
        %v818 = vshrl.u32 %v817, 7
        %v819 = vsub.s32 %v816, %v818
        %v820 = vrot.slane %v806, %v819
        %v821 = vcombine.low %v337, %v355
        %v822 = vcombine.high %v337, %v355
        %v824 = vunpack.c.l.s4 1983009808
        %v825 = vunpack.c.0.s8 %v824
        %v826 = vlaneseq
        %v827 = vshrl.u32 %v826, 7
        %v828 = vsub.s32 %v825, %v827
        %v829 = vrot.slane %v821, %v828
        %v831 = vunpack.c.l.s4 1983009808
        %v832 = vunpack.c.0.s8 %v831
        %v833 = vlaneseq
        %v834 = vshrl.u32 %v833, 7
        %v835 = vsub.s32 %v832, %v834
        %v836 = vrot.slane %v822, %v835
        %v837 = vcombine.low %v364, %v382
        %v838 = vcombine.high %v364, %v382
        %v840 = vunpack.c.l.s4 1983009808
        %v841 = vunpack.c.0.s8 %v840
        %v842 = vlaneseq
        %v843 = vshrl.u32 %v842, 7
        %v844 = vsub.s32 %v841, %v843
        %v845 = vrot.slane %v837, %v844
        %v847 = vunpack.c.l.s4 1983009808
        %v848 = vunpack.c.0.s8 %v847
        %v849 = vlaneseq
        %v850 = vshrl.u32 %v849, 7
        %v851 = vsub.s32 %v848, %v850
        %v852 = vrot.slane %v838, %v851
        %v853 = vcombine.low %v373, %v391
        %v854 = vcombine.high %v373, %v391
        %v856 = vunpack.c.l.s4 1983009808
        %v857 = vunpack.c.0.s8 %v856
        %v858 = vlaneseq
        %v859 = vshrl.u32 %v858, 7
        %v860 = vsub.s32 %v857, %v859
        %v861 = vrot.slane %v853, %v860
        %v863 = vunpack.c.l.s4 1983009808
        %v864 = vunpack.c.0.s8 %v863
        %v865 = vlaneseq
        %v866 = vshrl.u32 %v865, 7
        %v867 = vsub.s32 %v864, %v866
        %v868 = vrot.slane %v854, %v867
        %v869 = vcombine.low %v813, %v829
        %v870 = vcombine.high %v813, %v829
        %v872 = vunpack.c.l.s4 1934713408
        %v873 = vunpack.c.0.s8 %v872
        %v874 = vlaneseq
        %v875 = vshrl.u32 %v874, 7
        %v876 = vsub.s32 %v873, %v875
        %v877 = vrot.slane %v869, %v876
        %v879 = vunpack.c.l.s4 1934713408
        %v880 = vunpack.c.0.s8 %v879
        %v881 = vlaneseq
        %v882 = vshrl.u32 %v881, 7
        %v883 = vsub.s32 %v880, %v882
        %v884 = vrot.slane %v870, %v883
        %v885 = vcombine.low %v820, %v836
        %v886 = vcombine.high %v820, %v836
        %v888 = vunpack.c.l.s4 1934713408
        %v889 = vunpack.c.0.s8 %v888
        %v890 = vlaneseq
        %v891 = vshrl.u32 %v890, 7
        %v892 = vsub.s32 %v889, %v891
        %v893 = vrot.slane %v885, %v892
        %v895 = vunpack.c.l.s4 1934713408
        %v896 = vunpack.c.0.s8 %v895
        %v897 = vlaneseq
        %v898 = vshrl.u32 %v897, 7
        %v899 = vsub.s32 %v896, %v898
        %v900 = vrot.slane %v886, %v899
        %v901 = vcombine.low %v845, %v861
        %v902 = vcombine.high %v845, %v861
        %v904 = vunpack.c.l.s4 1934713408
        %v905 = vunpack.c.0.s8 %v904
        %v906 = vlaneseq
        %v907 = vshrl.u32 %v906, 7
        %v908 = vsub.s32 %v905, %v907
        %v909 = vrot.slane %v901, %v908
        %v911 = vunpack.c.l.s4 1934713408
        %v912 = vunpack.c.0.s8 %v911
        %v913 = vlaneseq
        %v914 = vshrl.u32 %v913, 7
        %v915 = vsub.s32 %v912, %v914
        %v916 = vrot.slane %v902, %v915
        %v917 = vcombine.low %v852, %v868
        %v918 = vcombine.high %v852, %v868
        %v920 = vunpack.c.l.s4 1934713408
        %v921 = vunpack.c.0.s8 %v920
        %v922 = vlaneseq
        %v923 = vshrl.u32 %v922, 7
        %v924 = vsub.s32 %v921, %v923
        %v925 = vrot.slane %v917, %v924
        %v927 = vunpack.c.l.s4 1934713408
        %v928 = vunpack.c.0.s8 %v927
        %v929 = vlaneseq
        %v930 = vshrl.u32 %v929, 7
        %v931 = vsub.s32 %v928, %v930
        %v932 = vrot.slane %v918, %v931
        %v933 = vcombine.low %v877, %v909
        %v934 = vcombine.high %v877, %v909
        %v935 = vcombine.low %v884, %v916
        %v936 = vcombine.high %v884, %v916
        %v937 = vcombine.low %v893, %v925
        %v938 = vcombine.high %v893, %v925
        %v939 = vcombine.low %v900, %v932
        %v940 = vcombine.high %v900, %v932
        %v941 = vcombine.low %v261, %v282
        %v942 = vcombine.high %v261, %v282
        %v944 = vunpack.c.l.s4 1983009808
        %v945 = vunpack.c.0.s8 %v944
        %v946 = vlaneseq
        %v947 = vshrl.u32 %v946, 7
        %v948 = vsub.s32 %v945, %v947
        %v949 = vrot.slane %v941, %v948
        %v951 = vunpack.c.l.s4 1983009808
        %v952 = vunpack.c.0.s8 %v951
        %v953 = vlaneseq
        %v954 = vshrl.u32 %v953, 7
        %v955 = vsub.s32 %v952, %v954
        %v956 = vrot.slane %v942, %v955
        %v957 = vcombine.low %v273, %v291
        %v958 = vcombine.high %v273, %v291
        %v960 = vunpack.c.l.s4 1983009808
        %v961 = vunpack.c.0.s8 %v960
        %v962 = vlaneseq
        %v963 = vshrl.u32 %v962, 7
        %v964 = vsub.s32 %v961, %v963
        %v965 = vrot.slane %v957, %v964
        %v967 = vunpack.c.l.s4 1983009808
        %v968 = vunpack.c.0.s8 %v967
        %v969 = vlaneseq
        %v970 = vshrl.u32 %v969, 7
        %v971 = vsub.s32 %v968, %v970
        %v972 = vrot.slane %v958, %v971
        %v973 = vcombine.low %v300, %v318
        %v974 = vcombine.high %v300, %v318
        %v976 = vunpack.c.l.s4 1983009808
        %v977 = vunpack.c.0.s8 %v976
        %v978 = vlaneseq
        %v979 = vshrl.u32 %v978, 7
        %v980 = vsub.s32 %v977, %v979
        %v981 = vrot.slane %v973, %v980
        %v983 = vunpack.c.l.s4 1983009808
        %v984 = vunpack.c.0.s8 %v983
        %v985 = vlaneseq
        %v986 = vshrl.u32 %v985, 7
        %v987 = vsub.s32 %v984, %v986
        %v988 = vrot.slane %v974, %v987
        %v989 = vcombine.low %v309, %v327
        %v990 = vcombine.high %v309, %v327
        %v992 = vunpack.c.l.s4 1983009808
        %v993 = vunpack.c.0.s8 %v992
        %v994 = vlaneseq
        %v995 = vshrl.u32 %v994, 7
        %v996 = vsub.s32 %v993, %v995
        %v997 = vrot.slane %v989, %v996
        %v999 = vunpack.c.l.s4 1983009808
        %v1000 = vunpack.c.0.s8 %v999
        %v1001 = vlaneseq
        %v1002 = vshrl.u32 %v1001, 7
        %v1003 = vsub.s32 %v1000, %v1002
        %v1004 = vrot.slane %v990, %v1003
        %v1005 = vcombine.low %v949, %v965
        %v1006 = vcombine.high %v949, %v965
        %v1008 = vunpack.c.l.s4 1934713408
        %v1009 = vunpack.c.0.s8 %v1008
        %v1010 = vlaneseq
        %v1011 = vshrl.u32 %v1010, 7
        %v1012 = vsub.s32 %v1009, %v1011
        %v1013 = vrot.slane %v1005, %v1012
        %v1015 = vunpack.c.l.s4 1934713408
        %v1016 = vunpack.c.0.s8 %v1015
        %v1017 = vlaneseq
        %v1018 = vshrl.u32 %v1017, 7
        %v1019 = vsub.s32 %v1016, %v1018
        %v1020 = vrot.slane %v1006, %v1019
        %v1021 = vcombine.low %v956, %v972
        %v1022 = vcombine.high %v956, %v972
        %v1024 = vunpack.c.l.s4 1934713408
        %v1025 = vunpack.c.0.s8 %v1024
        %v1026 = vlaneseq
        %v1027 = vshrl.u32 %v1026, 7
        %v1028 = vsub.s32 %v1025, %v1027
        %v1029 = vrot.slane %v1021, %v1028
        %v1031 = vunpack.c.l.s4 1934713408
        %v1032 = vunpack.c.0.s8 %v1031
        %v1033 = vlaneseq
        %v1034 = vshrl.u32 %v1033, 7
        %v1035 = vsub.s32 %v1032, %v1034
        %v1036 = vrot.slane %v1022, %v1035
        %v1037 = vcombine.low %v981, %v997
        %v1038 = vcombine.high %v981, %v997
        %v1040 = vunpack.c.l.s4 1934713408
        %v1041 = vunpack.c.0.s8 %v1040
        %v1042 = vlaneseq
        %v1043 = vshrl.u32 %v1042, 7
        %v1044 = vsub.s32 %v1041, %v1043
        %v1045 = vrot.slane %v1037, %v1044
        %v1047 = vunpack.c.l.s4 1934713408
        %v1048 = vunpack.c.0.s8 %v1047
        %v1049 = vlaneseq
        %v1050 = vshrl.u32 %v1049, 7
        %v1051 = vsub.s32 %v1048, %v1050
        %v1052 = vrot.slane %v1038, %v1051
        %v1053 = vcombine.low %v988, %v1004
        %v1054 = vcombine.high %v988, %v1004
        %v1056 = vunpack.c.l.s4 1934713408
        %v1057 = vunpack.c.0.s8 %v1056
        %v1058 = vlaneseq
        %v1059 = vshrl.u32 %v1058, 7
        %v1060 = vsub.s32 %v1057, %v1059
        %v1061 = vrot.slane %v1053, %v1060
        %v1063 = vunpack.c.l.s4 1934713408
        %v1064 = vunpack.c.0.s8 %v1063
        %v1065 = vlaneseq
        %v1066 = vshrl.u32 %v1065, 7
        %v1067 = vsub.s32 %v1064, %v1066
        %v1068 = vrot.slane %v1054, %v1067
        %v1069 = vcombine.low %v1013, %v1045
        %v1070 = vcombine.high %v1013, %v1045
        %v1071 = vcombine.low %v1020, %v1052
        %v1072 = vcombine.high %v1020, %v1052
        %v1073 = vcombine.low %v1029, %v1061
        %v1074 = vcombine.high %v1029, %v1061
        %v1075 = vcombine.low %v1036, %v1068
        %v1076 = vcombine.high %v1036, %v1068
        %v1077 = vcombine.low %v263, %v348
        %v1078 = vcombine.high %v263, %v348
        %v1080 = vunpack.c.l.s4 1983009808
        %v1081 = vunpack.c.0.s8 %v1080
        %v1082 = vlaneseq
        %v1083 = vshrl.u32 %v1082, 7
        %v1084 = vsub.s32 %v1081, %v1083
        %v1085 = vrot.slane %v1077, %v1084
        %v1087 = vunpack.c.l.s4 1983009808
        %v1088 = vunpack.c.0.s8 %v1087
        %v1089 = vlaneseq
        %v1090 = vshrl.u32 %v1089, 7
        %v1091 = vsub.s32 %v1088, %v1090
        %v1092 = vrot.slane %v1078, %v1091
        %v1093 = vcombine.low %v339, %v357
        %v1094 = vcombine.high %v339, %v357
        %v1096 = vunpack.c.l.s4 1983009808
        %v1097 = vunpack.c.0.s8 %v1096
        %v1098 = vlaneseq
        %v1099 = vshrl.u32 %v1098, 7
        %v1100 = vsub.s32 %v1097, %v1099
        %v1101 = vrot.slane %v1093, %v1100
        %v1103 = vunpack.c.l.s4 1983009808
        %v1104 = vunpack.c.0.s8 %v1103
        %v1105 = vlaneseq
        %v1106 = vshrl.u32 %v1105, 7
        %v1107 = vsub.s32 %v1104, %v1106
        %v1108 = vrot.slane %v1094, %v1107
        %v1109 = vcombine.low %v366, %v384
        %v1110 = vcombine.high %v366, %v384
        %v1112 = vunpack.c.l.s4 1983009808
        %v1113 = vunpack.c.0.s8 %v1112
        %v1114 = vlaneseq
        %v1115 = vshrl.u32 %v1114, 7
        %v1116 = vsub.s32 %v1113, %v1115
        %v1117 = vrot.slane %v1109, %v1116
        %v1119 = vunpack.c.l.s4 1983009808
        %v1120 = vunpack.c.0.s8 %v1119
        %v1121 = vlaneseq
        %v1122 = vshrl.u32 %v1121, 7
        %v1123 = vsub.s32 %v1120, %v1122
        %v1124 = vrot.slane %v1110, %v1123
        %v1125 = vcombine.low %v375, %v393
        %v1126 = vcombine.high %v375, %v393
        %v1128 = vunpack.c.l.s4 1983009808
        %v1129 = vunpack.c.0.s8 %v1128
        %v1130 = vlaneseq
        %v1131 = vshrl.u32 %v1130, 7
        %v1132 = vsub.s32 %v1129, %v1131
        %v1133 = vrot.slane %v1125, %v1132
        %v1135 = vunpack.c.l.s4 1983009808
        %v1136 = vunpack.c.0.s8 %v1135
        %v1137 = vlaneseq
        %v1138 = vshrl.u32 %v1137, 7
        %v1139 = vsub.s32 %v1136, %v1138
        %v1140 = vrot.slane %v1126, %v1139
        %v1141 = vcombine.low %v1085, %v1101
        %v1142 = vcombine.high %v1085, %v1101
        %v1144 = vunpack.c.l.s4 1934713408
        %v1145 = vunpack.c.0.s8 %v1144
        %v1146 = vlaneseq
        %v1147 = vshrl.u32 %v1146, 7
        %v1148 = vsub.s32 %v1145, %v1147
        %v1149 = vrot.slane %v1141, %v1148
        %v1151 = vunpack.c.l.s4 1934713408
        %v1152 = vunpack.c.0.s8 %v1151
        %v1153 = vlaneseq
        %v1154 = vshrl.u32 %v1153, 7
        %v1155 = vsub.s32 %v1152, %v1154
        %v1156 = vrot.slane %v1142, %v1155
        %v1157 = vcombine.low %v1092, %v1108
        %v1158 = vcombine.high %v1092, %v1108
        %v1160 = vunpack.c.l.s4 1934713408
        %v1161 = vunpack.c.0.s8 %v1160
        %v1162 = vlaneseq
        %v1163 = vshrl.u32 %v1162, 7
        %v1164 = vsub.s32 %v1161, %v1163
        %v1165 = vrot.slane %v1157, %v1164
        %v1167 = vunpack.c.l.s4 1934713408
        %v1168 = vunpack.c.0.s8 %v1167
        %v1169 = vlaneseq
        %v1170 = vshrl.u32 %v1169, 7
        %v1171 = vsub.s32 %v1168, %v1170
        %v1172 = vrot.slane %v1158, %v1171
        %v1173 = vcombine.low %v1117, %v1133
        %v1174 = vcombine.high %v1117, %v1133
        %v1176 = vunpack.c.l.s4 1934713408
        %v1177 = vunpack.c.0.s8 %v1176
        %v1178 = vlaneseq
        %v1179 = vshrl.u32 %v1178, 7
        %v1180 = vsub.s32 %v1177, %v1179
        %v1181 = vrot.slane %v1173, %v1180
        %v1183 = vunpack.c.l.s4 1934713408
        %v1184 = vunpack.c.0.s8 %v1183
        %v1185 = vlaneseq
        %v1186 = vshrl.u32 %v1185, 7
        %v1187 = vsub.s32 %v1184, %v1186
        %v1188 = vrot.slane %v1174, %v1187
        %v1189 = vcombine.low %v1124, %v1140
        %v1190 = vcombine.high %v1124, %v1140
        %v1192 = vunpack.c.l.s4 1934713408
        %v1193 = vunpack.c.0.s8 %v1192
        %v1194 = vlaneseq
        %v1195 = vshrl.u32 %v1194, 7
        %v1196 = vsub.s32 %v1193, %v1195
        %v1197 = vrot.slane %v1189, %v1196
        %v1199 = vunpack.c.l.s4 1934713408
        %v1200 = vunpack.c.0.s8 %v1199
        %v1201 = vlaneseq
        %v1202 = vshrl.u32 %v1201, 7
        %v1203 = vsub.s32 %v1200, %v1202
        %v1204 = vrot.slane %v1190, %v1203
        %v1205 = vcombine.low %v1149, %v1181
        %v1206 = vcombine.high %v1149, %v1181
        %v1207 = vcombine.low %v1156, %v1188
        %v1208 = vcombine.high %v1156, %v1188
        %v1209 = vcombine.low %v1165, %v1197
        %v1210 = vcombine.high %v1165, %v1197
        %v1211 = vcombine.low %v1172, %v1204
        %v1212 = vcombine.high %v1172, %v1204
        %vm1213 = vcmask 130048
        %v1215 = vsel %vm1213, %v525, 0
        %v1218 = vsel %vm1213, %v661, 0
        %v1221 = vsel %vm1213, %v1069, 0
        %v1224 = vsel %vm1213, %v1205, 0
        %1226 = vmatprep.subr.mxu0 0.0
        %1227 = vmatpush1.xpose.msra.mxu0 0.0
        %1228 = vmatprep.subr.mxu0 0.0
        %1229 = vmatpush1.xpose.msra.mxu0 0.0
        %1230 = vmatprep.subr.mxu0 0.0
        %1231 = vmatpush1.xpose.msra.mxu0 0.0
        %1232 = vmatprep.subr.mxu0 0.0
        %1233 = vmatpush1.xpose.msra.mxu0 0.0
        %1234 = vmatprep.subr.mxu0 0.0
        %1235 = vmatpush1.xpose.msra.mxu0 0.0
        %1236 = vmatprep.subr.mxu0 0.0
        %1237 = vmatpush1.xpose.msra.mxu0 0.0
        %1238 = vmatprep.subr.mxu0 0.0
        %1239 = vmatpush1.xpose.msra.mxu0 0.0
        %1240 = vmatprep.subr.mxu0 0.0
        %1241 = vmatpush1.xpose.msra.mxu0 0.0
        %1242 = vmatprep.subr.mxu0 0.0
        %1243 = vmatpush1.xpose.msra.mxu0 0.0
        %1244 = vmatprep.subr.mxu0 0.0
        %1245 = vmatpush1.xpose.msra.mxu0 0.0
        %1246 = vmatprep.subr.mxu0 0.0
        %1247 = vmatpush1.xpose.msra.mxu0 0.0
        %1248 = vmatprep.subr.mxu0 0.0
        %1249 = vmatpush1.xpose.msra.mxu0 0.0
        %1250 = vmatprep.subr.mxu0 0.0
        %1251 = vmatpush1.xpose.msra.mxu0 0.0
        %1252 = vmatprep.subr.mxu0 0.0
        %1253 = vmatpush1.xpose.msra.mxu0 0.0
        %1254 = vmatprep.subr.mxu0 0.0
        %1255 = vmatpush1.xpose.msra.mxu0 %v1224
        %1256 = vmatprep.subr.mxu0 0.0
        %1257 = vmatpush1.xpose.msra.mxu0 %v1221
        %1258 = vmatprep.subr.mxu0 0.0
        %1259 = vmatpush2.xpose.msra.mxu0 0.0
        %1260 = vmatprep.subr.mxu0 0.0
        %1261 = vmatpush2.xpose.msra.mxu0 0.0
        %1262 = vmatprep.subr.mxu0 0.0
        %1263 = vmatpush2.xpose.msra.mxu0 0.0
        %1264 = vmatprep.subr.mxu0 0.0
        %1265 = vmatpush2.xpose.msra.mxu0 0.0
        %1266 = vmatprep.subr.mxu0 0.0
        %1267 = vmatpush2.xpose.msra.mxu0 0.0
        %1268 = vmatprep.subr.mxu0 0.0
        %1269 = vmatpush2.xpose.msra.mxu0 0.0
        %1270 = vmatprep.subr.mxu0 0.0
        %1271 = vmatpush2.xpose.msra.mxu0 0.0
        %1272 = vmatprep.subr.mxu0 0.0
        %1273 = vmatpush2.xpose.msra.mxu0 0.0
        %1274 = vmatprep.subr.mxu0 0.0
        %1275 = vmatpush2.xpose.msra.mxu0 0.0
        %1276 = vmatprep.subr.mxu0 0.0
        %1277 = vmatpush2.xpose.msra.mxu0 0.0
        %1278 = vmatprep.subr.mxu0 0.0
        %1279 = vmatpush2.xpose.msra.mxu0 0.0
        %1280 = vmatprep.subr.mxu0 0.0
        %1281 = vmatpush2.xpose.msra.mxu0 0.0
        %1282 = vmatprep.subr.mxu0 0.0
        %1283 = vmatpush2.xpose.msra.mxu0 0.0
        %1284 = vmatprep.subr.mxu0 0.0
        %1285 = vmatpush2.xpose.msra.mxu0 0.0
        %1286 = vmatprep.subr.mxu0 0.0
        %1287 = vmatpush2.xpose.msra.mxu0 0.0
        %1288 = vmatprep.subr.mxu0 0.0
        %1289 = vmatpush2.xpose.msra.mxu0 0.0
        %1290 = vmatprep.mubr.f32.mxu0 0.0
        %1291 = vmatmul.mubr.f32.gmra.mxu0 %v1215
        %v1292 = vpop.f32.mrf.mxu0
        %v1293 = vadd.f32 0.0, %v1292
        %v1294 = vpop.f32.mrf.mxu0
        %1295 = vmatprep.mubr.f32.mxu0 0.0
        %1296 = vmatmul.mubr.f32.gmra.mxu0 %v1218
        %v1297 = vpop.f32.mrf.mxu0
        %v1298 = vadd.f32 0.0, %v1297
        %v1299 = vpop.f32.mrf.mxu0
        %1300 = vdwg.mxu0
        %v1302 = vsel %vm1213, %v526, 0
        %v1305 = vsel %vm1213, %v662, 0
        %v1308 = vsel %vm1213, %v1070, 0
        %v1311 = vsel %vm1213, %v1206, 0
        %1313 = vmatprep.subr.mxu0 0.0
        %1314 = vmatpush1.xpose.msra.mxu0 0.0
        %1315 = vmatprep.subr.mxu0 0.0
        %1316 = vmatpush1.xpose.msra.mxu0 0.0
        %1317 = vmatprep.subr.mxu0 0.0
        %1318 = vmatpush1.xpose.msra.mxu0 0.0
        %1319 = vmatprep.subr.mxu0 0.0
        %1320 = vmatpush1.xpose.msra.mxu0 0.0
        %1321 = vmatprep.subr.mxu0 0.0
        %1322 = vmatpush1.xpose.msra.mxu0 0.0
        %1323 = vmatprep.subr.mxu0 0.0
        %1324 = vmatpush1.xpose.msra.mxu0 0.0
        %1325 = vmatprep.subr.mxu0 0.0
        %1326 = vmatpush1.xpose.msra.mxu0 0.0
        %1327 = vmatprep.subr.mxu0 0.0
        %1328 = vmatpush1.xpose.msra.mxu0 0.0
        %1329 = vmatprep.subr.mxu0 0.0
        %1330 = vmatpush1.xpose.msra.mxu0 0.0
        %1331 = vmatprep.subr.mxu0 0.0
        %1332 = vmatpush1.xpose.msra.mxu0 0.0
        %1333 = vmatprep.subr.mxu0 0.0
        %1334 = vmatpush1.xpose.msra.mxu0 0.0
        %1335 = vmatprep.subr.mxu0 0.0
        %1336 = vmatpush1.xpose.msra.mxu0 0.0
        %1337 = vmatprep.subr.mxu0 0.0
        %1338 = vmatpush1.xpose.msra.mxu0 0.0
        %1339 = vmatprep.subr.mxu0 0.0
        %1340 = vmatpush1.xpose.msra.mxu0 0.0
        %1341 = vmatprep.subr.mxu0 0.0
        %1342 = vmatpush1.xpose.msra.mxu0 %v1311
        %1343 = vmatprep.subr.mxu0 0.0
        %1344 = vmatpush1.xpose.msra.mxu0 %v1308
        %1345 = vmatprep.subr.mxu0 0.0
        %1346 = vmatpush2.xpose.msra.mxu0 0.0
        %1347 = vmatprep.subr.mxu0 0.0
        %1348 = vmatpush2.xpose.msra.mxu0 0.0
        %1349 = vmatprep.subr.mxu0 0.0
        %1350 = vmatpush2.xpose.msra.mxu0 0.0
        %1351 = vmatprep.subr.mxu0 0.0
        %1352 = vmatpush2.xpose.msra.mxu0 0.0
        %1353 = vmatprep.subr.mxu0 0.0
        %1354 = vmatpush2.xpose.msra.mxu0 0.0
        %1355 = vmatprep.subr.mxu0 0.0
        %1356 = vmatpush2.xpose.msra.mxu0 0.0
        %1357 = vmatprep.subr.mxu0 0.0
        %1358 = vmatpush2.xpose.msra.mxu0 0.0
        %1359 = vmatprep.subr.mxu0 0.0
        %1360 = vmatpush2.xpose.msra.mxu0 0.0
        %1361 = vmatprep.subr.mxu0 0.0
        %1362 = vmatpush2.xpose.msra.mxu0 0.0
        %1363 = vmatprep.subr.mxu0 0.0
        %1364 = vmatpush2.xpose.msra.mxu0 0.0
        %1365 = vmatprep.subr.mxu0 0.0
        %1366 = vmatpush2.xpose.msra.mxu0 0.0
        %1367 = vmatprep.subr.mxu0 0.0
        %1368 = vmatpush2.xpose.msra.mxu0 0.0
        %1369 = vmatprep.subr.mxu0 0.0
        %1370 = vmatpush2.xpose.msra.mxu0 0.0
        %1371 = vmatprep.subr.mxu0 0.0
        %1372 = vmatpush2.xpose.msra.mxu0 0.0
        %1373 = vmatprep.subr.mxu0 0.0
        %1374 = vmatpush2.xpose.msra.mxu0 0.0
        %1375 = vmatprep.subr.mxu0 0.0
        %1376 = vmatpush2.xpose.msra.mxu0 0.0
        %1377 = vmatprep.mubr.f32.mxu0 0.0
        %1378 = vmatmul.mubr.f32.gmra.mxu0 %v1302
        %v1379 = vpop.f32.mrf.mxu0
        %v1380 = vadd.f32 0.0, %v1379
        %v1381 = vpop.f32.mrf.mxu0
        %1382 = vmatprep.mubr.f32.mxu0 0.0
        %1383 = vmatmul.mubr.f32.gmra.mxu0 %v1305
        %v1384 = vpop.f32.mrf.mxu0
        %v1385 = vadd.f32 0.0, %v1384
        %v1386 = vpop.f32.mrf.mxu0
        %1387 = vdwg.mxu0
        %v1389 = vsel %vm1213, %v527, 0
        %v1392 = vsel %vm1213, %v663, 0
        %v1395 = vsel %vm1213, %v1071, 0
        %v1398 = vsel %vm1213, %v1207, 0
        %1400 = vmatprep.subr.mxu0 0.0
        %1401 = vmatpush1.xpose.msra.mxu0 0.0
        %1402 = vmatprep.subr.mxu0 0.0
        %1403 = vmatpush1.xpose.msra.mxu0 0.0
        %1404 = vmatprep.subr.mxu0 0.0
        %1405 = vmatpush1.xpose.msra.mxu0 0.0
        %1406 = vmatprep.subr.mxu0 0.0
        %1407 = vmatpush1.xpose.msra.mxu0 0.0
        %1408 = vmatprep.subr.mxu0 0.0
        %1409 = vmatpush1.xpose.msra.mxu0 0.0
        %1410 = vmatprep.subr.mxu0 0.0
        %1411 = vmatpush1.xpose.msra.mxu0 0.0
        %1412 = vmatprep.subr.mxu0 0.0
        %1413 = vmatpush1.xpose.msra.mxu0 0.0
        %1414 = vmatprep.subr.mxu0 0.0
        %1415 = vmatpush1.xpose.msra.mxu0 0.0
        %1416 = vmatprep.subr.mxu0 0.0
        %1417 = vmatpush1.xpose.msra.mxu0 0.0
        %1418 = vmatprep.subr.mxu0 0.0
        %1419 = vmatpush1.xpose.msra.mxu0 0.0
        %1420 = vmatprep.subr.mxu0 0.0
        %1421 = vmatpush1.xpose.msra.mxu0 0.0
        %1422 = vmatprep.subr.mxu0 0.0
        %1423 = vmatpush1.xpose.msra.mxu0 0.0
        %1424 = vmatprep.subr.mxu0 0.0
        %1425 = vmatpush1.xpose.msra.mxu0 0.0
        %1426 = vmatprep.subr.mxu0 0.0
        %1427 = vmatpush1.xpose.msra.mxu0 0.0
        %1428 = vmatprep.subr.mxu0 0.0
        %1429 = vmatpush1.xpose.msra.mxu0 %v1398
        %1430 = vmatprep.subr.mxu0 0.0
        %1431 = vmatpush1.xpose.msra.mxu0 %v1395
        %1432 = vmatprep.subr.mxu0 0.0
        %1433 = vmatpush2.xpose.msra.mxu0 0.0
        %1434 = vmatprep.subr.mxu0 0.0
        %1435 = vmatpush2.xpose.msra.mxu0 0.0
        %1436 = vmatprep.subr.mxu0 0.0
        %1437 = vmatpush2.xpose.msra.mxu0 0.0
        %1438 = vmatprep.subr.mxu0 0.0
        %1439 = vmatpush2.xpose.msra.mxu0 0.0
        %1440 = vmatprep.subr.mxu0 0.0
        %1441 = vmatpush2.xpose.msra.mxu0 0.0
        %1442 = vmatprep.subr.mxu0 0.0
        %1443 = vmatpush2.xpose.msra.mxu0 0.0
        %1444 = vmatprep.subr.mxu0 0.0
        %1445 = vmatpush2.xpose.msra.mxu0 0.0
        %1446 = vmatprep.subr.mxu0 0.0
        %1447 = vmatpush2.xpose.msra.mxu0 0.0
        %1448 = vmatprep.subr.mxu0 0.0
        %1449 = vmatpush2.xpose.msra.mxu0 0.0
        %1450 = vmatprep.subr.mxu0 0.0
        %1451 = vmatpush2.xpose.msra.mxu0 0.0
        %1452 = vmatprep.subr.mxu0 0.0
        %1453 = vmatpush2.xpose.msra.mxu0 0.0
        %1454 = vmatprep.subr.mxu0 0.0
        %1455 = vmatpush2.xpose.msra.mxu0 0.0
        %1456 = vmatprep.subr.mxu0 0.0
        %1457 = vmatpush2.xpose.msra.mxu0 0.0
        %1458 = vmatprep.subr.mxu0 0.0
        %1459 = vmatpush2.xpose.msra.mxu0 0.0
        %1460 = vmatprep.subr.mxu0 0.0
        %1461 = vmatpush2.xpose.msra.mxu0 0.0
        %1462 = vmatprep.subr.mxu0 0.0
        %1463 = vmatpush2.xpose.msra.mxu0 0.0
        %1464 = vmatprep.mubr.f32.mxu0 0.0
        %1465 = vmatmul.mubr.f32.gmra.mxu0 %v1389
        %v1466 = vpop.f32.mrf.mxu0
        %v1467 = vadd.f32 0.0, %v1466
        %v1468 = vpop.f32.mrf.mxu0
        %1469 = vmatprep.mubr.f32.mxu0 0.0
        %1470 = vmatmul.mubr.f32.gmra.mxu0 %v1392
        %v1471 = vpop.f32.mrf.mxu0
        %v1472 = vadd.f32 0.0, %v1471
        %v1473 = vpop.f32.mrf.mxu0
        %1474 = vdwg.mxu0
        %v1476 = vsel %vm1213, %v528, 0
        %v1479 = vsel %vm1213, %v664, 0
        %v1482 = vsel %vm1213, %v1072, 0
        %v1485 = vsel %vm1213, %v1208, 0
        %1487 = vmatprep.subr.mxu0 0.0
        %1488 = vmatpush1.xpose.msra.mxu0 0.0
        %1489 = vmatprep.subr.mxu0 0.0
        %1490 = vmatpush1.xpose.msra.mxu0 0.0
        %1491 = vmatprep.subr.mxu0 0.0
        %1492 = vmatpush1.xpose.msra.mxu0 0.0
        %1493 = vmatprep.subr.mxu0 0.0
        %1494 = vmatpush1.xpose.msra.mxu0 0.0
        %1495 = vmatprep.subr.mxu0 0.0
        %1496 = vmatpush1.xpose.msra.mxu0 0.0
        %1497 = vmatprep.subr.mxu0 0.0
        %1498 = vmatpush1.xpose.msra.mxu0 0.0
        %1499 = vmatprep.subr.mxu0 0.0
        %1500 = vmatpush1.xpose.msra.mxu0 0.0
        %1501 = vmatprep.subr.mxu0 0.0
        %1502 = vmatpush1.xpose.msra.mxu0 0.0
        %1503 = vmatprep.subr.mxu0 0.0
        %1504 = vmatpush1.xpose.msra.mxu0 0.0
        %1505 = vmatprep.subr.mxu0 0.0
        %1506 = vmatpush1.xpose.msra.mxu0 0.0
        %1507 = vmatprep.subr.mxu0 0.0
        %1508 = vmatpush1.xpose.msra.mxu0 0.0
        %1509 = vmatprep.subr.mxu0 0.0
        %1510 = vmatpush1.xpose.msra.mxu0 0.0
        %1511 = vmatprep.subr.mxu0 0.0
        %1512 = vmatpush1.xpose.msra.mxu0 0.0
        %1513 = vmatprep.subr.mxu0 0.0
        %1514 = vmatpush1.xpose.msra.mxu0 0.0
        %1515 = vmatprep.subr.mxu0 0.0
        %1516 = vmatpush1.xpose.msra.mxu0 %v1485
        %1517 = vmatprep.subr.mxu0 0.0
        %1518 = vmatpush1.xpose.msra.mxu0 %v1482
        %1519 = vmatprep.subr.mxu0 0.0
        %1520 = vmatpush2.xpose.msra.mxu0 0.0
        %1521 = vmatprep.subr.mxu0 0.0
        %1522 = vmatpush2.xpose.msra.mxu0 0.0
        %1523 = vmatprep.subr.mxu0 0.0
        %1524 = vmatpush2.xpose.msra.mxu0 0.0
        %1525 = vmatprep.subr.mxu0 0.0
        %1526 = vmatpush2.xpose.msra.mxu0 0.0
        %1527 = vmatprep.subr.mxu0 0.0
        %1528 = vmatpush2.xpose.msra.mxu0 0.0
        %1529 = vmatprep.subr.mxu0 0.0
        %1530 = vmatpush2.xpose.msra.mxu0 0.0
        %1531 = vmatprep.subr.mxu0 0.0
        %1532 = vmatpush2.xpose.msra.mxu0 0.0
        %1533 = vmatprep.subr.mxu0 0.0
        %1534 = vmatpush2.xpose.msra.mxu0 0.0
        %1535 = vmatprep.subr.mxu0 0.0
        %1536 = vmatpush2.xpose.msra.mxu0 0.0
        %1537 = vmatprep.subr.mxu0 0.0
        %1538 = vmatpush2.xpose.msra.mxu0 0.0
        %1539 = vmatprep.subr.mxu0 0.0
        %1540 = vmatpush2.xpose.msra.mxu0 0.0
        %1541 = vmatprep.subr.mxu0 0.0
        %1542 = vmatpush2.xpose.msra.mxu0 0.0
        %1543 = vmatprep.subr.mxu0 0.0
        %1544 = vmatpush2.xpose.msra.mxu0 0.0
        %1545 = vmatprep.subr.mxu0 0.0
        %1546 = vmatpush2.xpose.msra.mxu0 0.0
        %1547 = vmatprep.subr.mxu0 0.0
        %1548 = vmatpush2.xpose.msra.mxu0 0.0
        %1549 = vmatprep.subr.mxu0 0.0
        %1550 = vmatpush2.xpose.msra.mxu0 0.0
        %1551 = vmatprep.mubr.f32.mxu0 0.0
        %1552 = vmatmul.mubr.f32.gmra.mxu0 %v1476
        %v1553 = vpop.f32.mrf.mxu0
        %v1554 = vadd.f32 0.0, %v1553
        %v1555 = vpop.f32.mrf.mxu0
        %1556 = vmatprep.mubr.f32.mxu0 0.0
        %1557 = vmatmul.mubr.f32.gmra.mxu0 %v1479
        %v1558 = vpop.f32.mrf.mxu0
        %v1559 = vadd.f32 0.0, %v1558
        %v1560 = vpop.f32.mrf.mxu0
        %1561 = vdwg.mxu0
        %v1563 = vsel %vm1213, %v529, 0
        %v1566 = vsel %vm1213, %v665, 0
        %v1569 = vsel %vm1213, %v1073, 0
        %v1572 = vsel %vm1213, %v1209, 0
        %1574 = vmatprep.subr.mxu0 0.0
        %1575 = vmatpush1.xpose.msra.mxu0 0.0
        %1576 = vmatprep.subr.mxu0 0.0
        %1577 = vmatpush1.xpose.msra.mxu0 0.0
        %1578 = vmatprep.subr.mxu0 0.0
        %1579 = vmatpush1.xpose.msra.mxu0 0.0
        %1580 = vmatprep.subr.mxu0 0.0
        %1581 = vmatpush1.xpose.msra.mxu0 0.0
        %1582 = vmatprep.subr.mxu0 0.0
        %1583 = vmatpush1.xpose.msra.mxu0 0.0
        %1584 = vmatprep.subr.mxu0 0.0
        %1585 = vmatpush1.xpose.msra.mxu0 0.0
        %1586 = vmatprep.subr.mxu0 0.0
        %1587 = vmatpush1.xpose.msra.mxu0 0.0
        %1588 = vmatprep.subr.mxu0 0.0
        %1589 = vmatpush1.xpose.msra.mxu0 0.0
        %1590 = vmatprep.subr.mxu0 0.0
        %1591 = vmatpush1.xpose.msra.mxu0 0.0
        %1592 = vmatprep.subr.mxu0 0.0
        %1593 = vmatpush1.xpose.msra.mxu0 0.0
        %1594 = vmatprep.subr.mxu0 0.0
        %1595 = vmatpush1.xpose.msra.mxu0 0.0
        %1596 = vmatprep.subr.mxu0 0.0
        %1597 = vmatpush1.xpose.msra.mxu0 0.0
        %1598 = vmatprep.subr.mxu0 0.0
        %1599 = vmatpush1.xpose.msra.mxu0 0.0
        %1600 = vmatprep.subr.mxu0 0.0
        %1601 = vmatpush1.xpose.msra.mxu0 0.0
        %1602 = vmatprep.subr.mxu0 0.0
        %1603 = vmatpush1.xpose.msra.mxu0 %v1572
        %1604 = vmatprep.subr.mxu0 0.0
        %1605 = vmatpush1.xpose.msra.mxu0 %v1569
        %1606 = vmatprep.subr.mxu0 0.0
        %1607 = vmatpush2.xpose.msra.mxu0 0.0
        %1608 = vmatprep.subr.mxu0 0.0
        %1609 = vmatpush2.xpose.msra.mxu0 0.0
        %1610 = vmatprep.subr.mxu0 0.0
        %1611 = vmatpush2.xpose.msra.mxu0 0.0
        %1612 = vmatprep.subr.mxu0 0.0
        %1613 = vmatpush2.xpose.msra.mxu0 0.0
        %1614 = vmatprep.subr.mxu0 0.0
        %1615 = vmatpush2.xpose.msra.mxu0 0.0
        %1616 = vmatprep.subr.mxu0 0.0
        %1617 = vmatpush2.xpose.msra.mxu0 0.0
        %1618 = vmatprep.subr.mxu0 0.0
        %1619 = vmatpush2.xpose.msra.mxu0 0.0
        %1620 = vmatprep.subr.mxu0 0.0
        %1621 = vmatpush2.xpose.msra.mxu0 0.0
        %1622 = vmatprep.subr.mxu0 0.0
        %1623 = vmatpush2.xpose.msra.mxu0 0.0
        %1624 = vmatprep.subr.mxu0 0.0
        %1625 = vmatpush2.xpose.msra.mxu0 0.0
        %1626 = vmatprep.subr.mxu0 0.0
        %1627 = vmatpush2.xpose.msra.mxu0 0.0
        %1628 = vmatprep.subr.mxu0 0.0
        %1629 = vmatpush2.xpose.msra.mxu0 0.0
        %1630 = vmatprep.subr.mxu0 0.0
        %1631 = vmatpush2.xpose.msra.mxu0 0.0
        %1632 = vmatprep.subr.mxu0 0.0
        %1633 = vmatpush2.xpose.msra.mxu0 0.0
        %1634 = vmatprep.subr.mxu0 0.0
        %1635 = vmatpush2.xpose.msra.mxu0 0.0
        %1636 = vmatprep.subr.mxu0 0.0
        %1637 = vmatpush2.xpose.msra.mxu0 0.0
        %1638 = vmatprep.mubr.f32.mxu0 0.0
        %1639 = vmatmul.mubr.f32.gmra.mxu0 %v1563
        %v1640 = vpop.f32.mrf.mxu0
        %v1641 = vadd.f32 0.0, %v1640
        %v1642 = vpop.f32.mrf.mxu0
        %1643 = vmatprep.mubr.f32.mxu0 0.0
        %1644 = vmatmul.mubr.f32.gmra.mxu0 %v1566
        %v1645 = vpop.f32.mrf.mxu0
        %v1646 = vadd.f32 0.0, %v1645
        %v1647 = vpop.f32.mrf.mxu0
        %1648 = vdwg.mxu0
        %v1650 = vsel %vm1213, %v530, 0
        %v1653 = vsel %vm1213, %v666, 0
        %v1656 = vsel %vm1213, %v1074, 0
        %v1659 = vsel %vm1213, %v1210, 0
        %1661 = vmatprep.subr.mxu0 0.0
        %1662 = vmatpush1.xpose.msra.mxu0 0.0
        %1663 = vmatprep.subr.mxu0 0.0
        %1664 = vmatpush1.xpose.msra.mxu0 0.0
        %1665 = vmatprep.subr.mxu0 0.0
        %1666 = vmatpush1.xpose.msra.mxu0 0.0
        %1667 = vmatprep.subr.mxu0 0.0
        %1668 = vmatpush1.xpose.msra.mxu0 0.0
        %1669 = vmatprep.subr.mxu0 0.0
        %1670 = vmatpush1.xpose.msra.mxu0 0.0
        %1671 = vmatprep.subr.mxu0 0.0
        %1672 = vmatpush1.xpose.msra.mxu0 0.0
        %1673 = vmatprep.subr.mxu0 0.0
        %1674 = vmatpush1.xpose.msra.mxu0 0.0
        %1675 = vmatprep.subr.mxu0 0.0
        %1676 = vmatpush1.xpose.msra.mxu0 0.0
        %1677 = vmatprep.subr.mxu0 0.0
        %1678 = vmatpush1.xpose.msra.mxu0 0.0
        %1679 = vmatprep.subr.mxu0 0.0
        %1680 = vmatpush1.xpose.msra.mxu0 0.0
        %1681 = vmatprep.subr.mxu0 0.0
        %1682 = vmatpush1.xpose.msra.mxu0 0.0
        %1683 = vmatprep.subr.mxu0 0.0
        %1684 = vmatpush1.xpose.msra.mxu0 0.0
        %1685 = vmatprep.subr.mxu0 0.0
        %1686 = vmatpush1.xpose.msra.mxu0 0.0
        %1687 = vmatprep.subr.mxu0 0.0
        %1688 = vmatpush1.xpose.msra.mxu0 0.0
        %1689 = vmatprep.subr.mxu0 0.0
        %1690 = vmatpush1.xpose.msra.mxu0 %v1659
        %1691 = vmatprep.subr.mxu0 0.0
        %1692 = vmatpush1.xpose.msra.mxu0 %v1656
        %1693 = vmatprep.subr.mxu0 0.0
        %1694 = vmatpush2.xpose.msra.mxu0 0.0
        %1695 = vmatprep.subr.mxu0 0.0
        %1696 = vmatpush2.xpose.msra.mxu0 0.0
        %1697 = vmatprep.subr.mxu0 0.0
        %1698 = vmatpush2.xpose.msra.mxu0 0.0
        %1699 = vmatprep.subr.mxu0 0.0
        %1700 = vmatpush2.xpose.msra.mxu0 0.0
        %1701 = vmatprep.subr.mxu0 0.0
        %1702 = vmatpush2.xpose.msra.mxu0 0.0
        %1703 = vmatprep.subr.mxu0 0.0
        %1704 = vmatpush2.xpose.msra.mxu0 0.0
        %1705 = vmatprep.subr.mxu0 0.0
        %1706 = vmatpush2.xpose.msra.mxu0 0.0
        %1707 = vmatprep.subr.mxu0 0.0
        %1708 = vmatpush2.xpose.msra.mxu0 0.0
        %1709 = vmatprep.subr.mxu0 0.0
        %1710 = vmatpush2.xpose.msra.mxu0 0.0
        %1711 = vmatprep.subr.mxu0 0.0
        %1712 = vmatpush2.xpose.msra.mxu0 0.0
        %1713 = vmatprep.subr.mxu0 0.0
        %1714 = vmatpush2.xpose.msra.mxu0 0.0
        %1715 = vmatprep.subr.mxu0 0.0
        %1716 = vmatpush2.xpose.msra.mxu0 0.0
        %1717 = vmatprep.subr.mxu0 0.0
        %1718 = vmatpush2.xpose.msra.mxu0 0.0
        %1719 = vmatprep.subr.mxu0 0.0
        %1720 = vmatpush2.xpose.msra.mxu0 0.0
        %1721 = vmatprep.subr.mxu0 0.0
        %1722 = vmatpush2.xpose.msra.mxu0 0.0
        %1723 = vmatprep.subr.mxu0 0.0
        %1724 = vmatpush2.xpose.msra.mxu0 0.0
        %1725 = vmatprep.mubr.f32.mxu0 0.0
        %1726 = vmatmul.mubr.f32.gmra.mxu0 %v1650
        %v1727 = vpop.f32.mrf.mxu0
        %v1728 = vadd.f32 0.0, %v1727
        %v1729 = vpop.f32.mrf.mxu0
        %1730 = vmatprep.mubr.f32.mxu0 0.0
        %1731 = vmatmul.mubr.f32.gmra.mxu0 %v1653
        %v1732 = vpop.f32.mrf.mxu0
        %v1733 = vadd.f32 0.0, %v1732
        %v1734 = vpop.f32.mrf.mxu0
        %1735 = vdwg.mxu0
        %v1737 = vsel %vm1213, %v531, 0
        %v1740 = vsel %vm1213, %v667, 0
        %v1743 = vsel %vm1213, %v1075, 0
        %v1746 = vsel %vm1213, %v1211, 0
        %1748 = vmatprep.subr.mxu0 0.0
        %1749 = vmatpush1.xpose.msra.mxu0 0.0
        %1750 = vmatprep.subr.mxu0 0.0
        %1751 = vmatpush1.xpose.msra.mxu0 0.0
        %1752 = vmatprep.subr.mxu0 0.0
        %1753 = vmatpush1.xpose.msra.mxu0 0.0
        %1754 = vmatprep.subr.mxu0 0.0
        %1755 = vmatpush1.xpose.msra.mxu0 0.0
        %1756 = vmatprep.subr.mxu0 0.0
        %1757 = vmatpush1.xpose.msra.mxu0 0.0
        %1758 = vmatprep.subr.mxu0 0.0
        %1759 = vmatpush1.xpose.msra.mxu0 0.0
        %1760 = vmatprep.subr.mxu0 0.0
        %1761 = vmatpush1.xpose.msra.mxu0 0.0
        %1762 = vmatprep.subr.mxu0 0.0
        %1763 = vmatpush1.xpose.msra.mxu0 0.0
        %1764 = vmatprep.subr.mxu0 0.0
        %1765 = vmatpush1.xpose.msra.mxu0 0.0
        %1766 = vmatprep.subr.mxu0 0.0
        %1767 = vmatpush1.xpose.msra.mxu0 0.0
        %1768 = vmatprep.subr.mxu0 0.0
        %1769 = vmatpush1.xpose.msra.mxu0 0.0
        %1770 = vmatprep.subr.mxu0 0.0
        %1771 = vmatpush1.xpose.msra.mxu0 0.0
        %1772 = vmatprep.subr.mxu0 0.0
        %1773 = vmatpush1.xpose.msra.mxu0 0.0
        %1774 = vmatprep.subr.mxu0 0.0
        %1775 = vmatpush1.xpose.msra.mxu0 0.0
        %1776 = vmatprep.subr.mxu0 0.0
        %1777 = vmatpush1.xpose.msra.mxu0 %v1746
        %1778 = vmatprep.subr.mxu0 0.0
        %1779 = vmatpush1.xpose.msra.mxu0 %v1743
        %1780 = vmatprep.subr.mxu0 0.0
        %1781 = vmatpush2.xpose.msra.mxu0 0.0
        %1782 = vmatprep.subr.mxu0 0.0
        %1783 = vmatpush2.xpose.msra.mxu0 0.0
        %1784 = vmatprep.subr.mxu0 0.0
        %1785 = vmatpush2.xpose.msra.mxu0 0.0
        %1786 = vmatprep.subr.mxu0 0.0
        %1787 = vmatpush2.xpose.msra.mxu0 0.0
        %1788 = vmatprep.subr.mxu0 0.0
        %1789 = vmatpush2.xpose.msra.mxu0 0.0
        %1790 = vmatprep.subr.mxu0 0.0
        %1791 = vmatpush2.xpose.msra.mxu0 0.0
        %1792 = vmatprep.subr.mxu0 0.0
        %1793 = vmatpush2.xpose.msra.mxu0 0.0
        %1794 = vmatprep.subr.mxu0 0.0
        %1795 = vmatpush2.xpose.msra.mxu0 0.0
        %1796 = vmatprep.subr.mxu0 0.0
        %1797 = vmatpush2.xpose.msra.mxu0 0.0
        %1798 = vmatprep.subr.mxu0 0.0
        %1799 = vmatpush2.xpose.msra.mxu0 0.0
        %1800 = vmatprep.subr.mxu0 0.0
        %1801 = vmatpush2.xpose.msra.mxu0 0.0
        %1802 = vmatprep.subr.mxu0 0.0
        %1803 = vmatpush2.xpose.msra.mxu0 0.0
        %1804 = vmatprep.subr.mxu0 0.0
        %1805 = vmatpush2.xpose.msra.mxu0 0.0
        %1806 = vmatprep.subr.mxu0 0.0
        %1807 = vmatpush2.xpose.msra.mxu0 0.0
        %1808 = vmatprep.subr.mxu0 0.0
        %1809 = vmatpush2.xpose.msra.mxu0 0.0
        %1810 = vmatprep.subr.mxu0 0.0
        %1811 = vmatpush2.xpose.msra.mxu0 0.0
        %1812 = vmatprep.mubr.f32.mxu0 0.0
        %1813 = vmatmul.mubr.f32.gmra.mxu0 %v1737
        %v1814 = vpop.f32.mrf.mxu0
        %v1815 = vadd.f32 0.0, %v1814
        %v1816 = vpop.f32.mrf.mxu0
        %1817 = vmatprep.mubr.f32.mxu0 0.0
        %1818 = vmatmul.mubr.f32.gmra.mxu0 %v1740
        %v1819 = vpop.f32.mrf.mxu0
        %v1820 = vadd.f32 0.0, %v1819
        %v1821 = vpop.f32.mrf.mxu0
        %1822 = vdwg.mxu0
        %v1824 = vsel %vm1213, %v532, 0
        %v1827 = vsel %vm1213, %v668, 0
        %v1830 = vsel %vm1213, %v1076, 0
        %v1833 = vsel %vm1213, %v1212, 0
        %1835 = vmatprep.subr.mxu0 0.0
        %1836 = vmatpush1.xpose.msra.mxu0 0.0
        %1837 = vmatprep.subr.mxu0 0.0
        %1838 = vmatpush1.xpose.msra.mxu0 0.0
        %1839 = vmatprep.subr.mxu0 0.0
        %1840 = vmatpush1.xpose.msra.mxu0 0.0
        %1841 = vmatprep.subr.mxu0 0.0
        %1842 = vmatpush1.xpose.msra.mxu0 0.0
        %1843 = vmatprep.subr.mxu0 0.0
        %1844 = vmatpush1.xpose.msra.mxu0 0.0
        %1845 = vmatprep.subr.mxu0 0.0
        %1846 = vmatpush1.xpose.msra.mxu0 0.0
        %1847 = vmatprep.subr.mxu0 0.0
        %1848 = vmatpush1.xpose.msra.mxu0 0.0
        %1849 = vmatprep.subr.mxu0 0.0
        %1850 = vmatpush1.xpose.msra.mxu0 0.0
        %1851 = vmatprep.subr.mxu0 0.0
        %1852 = vmatpush1.xpose.msra.mxu0 0.0
        %1853 = vmatprep.subr.mxu0 0.0
        %1854 = vmatpush1.xpose.msra.mxu0 0.0
        %1855 = vmatprep.subr.mxu0 0.0
        %1856 = vmatpush1.xpose.msra.mxu0 0.0
        %1857 = vmatprep.subr.mxu0 0.0
        %1858 = vmatpush1.xpose.msra.mxu0 0.0
        %1859 = vmatprep.subr.mxu0 0.0
        %1860 = vmatpush1.xpose.msra.mxu0 0.0
        %1861 = vmatprep.subr.mxu0 0.0
        %1862 = vmatpush1.xpose.msra.mxu0 0.0
        %1863 = vmatprep.subr.mxu0 0.0
        %1864 = vmatpush1.xpose.msra.mxu0 %v1833
        %1865 = vmatprep.subr.mxu0 0.0
        %1866 = vmatpush1.xpose.msra.mxu0 %v1830
        %1867 = vmatprep.subr.mxu0 0.0
        %1868 = vmatpush2.xpose.msra.mxu0 0.0
        %1869 = vmatprep.subr.mxu0 0.0
        %1870 = vmatpush2.xpose.msra.mxu0 0.0
        %1871 = vmatprep.subr.mxu0 0.0
        %1872 = vmatpush2.xpose.msra.mxu0 0.0
        %1873 = vmatprep.subr.mxu0 0.0
        %1874 = vmatpush2.xpose.msra.mxu0 0.0
        %1875 = vmatprep.subr.mxu0 0.0
        %1876 = vmatpush2.xpose.msra.mxu0 0.0
        %1877 = vmatprep.subr.mxu0 0.0
        %1878 = vmatpush2.xpose.msra.mxu0 0.0
        %1879 = vmatprep.subr.mxu0 0.0
        %1880 = vmatpush2.xpose.msra.mxu0 0.0
        %1881 = vmatprep.subr.mxu0 0.0
        %1882 = vmatpush2.xpose.msra.mxu0 0.0
        %1883 = vmatprep.subr.mxu0 0.0
        %1884 = vmatpush2.xpose.msra.mxu0 0.0
        %1885 = vmatprep.subr.mxu0 0.0
        %1886 = vmatpush2.xpose.msra.mxu0 0.0
        %1887 = vmatprep.subr.mxu0 0.0
        %1888 = vmatpush2.xpose.msra.mxu0 0.0
        %1889 = vmatprep.subr.mxu0 0.0
        %1890 = vmatpush2.xpose.msra.mxu0 0.0
        %1891 = vmatprep.subr.mxu0 0.0
        %1892 = vmatpush2.xpose.msra.mxu0 0.0
        %1893 = vmatprep.subr.mxu0 0.0
        %1894 = vmatpush2.xpose.msra.mxu0 0.0
        %1895 = vmatprep.subr.mxu0 0.0
        %1896 = vmatpush2.xpose.msra.mxu0 0.0
        %1897 = vmatprep.subr.mxu0 0.0
        %1898 = vmatpush2.xpose.msra.mxu0 0.0
        %1899 = vmatprep.mubr.f32.mxu0 0.0
        %1900 = vmatmul.mubr.f32.gmra.mxu0 %v1824
        %v1901 = vpop.f32.mrf.mxu0
        %v1902 = vadd.f32 0.0, %v1901
        %v1903 = vpop.f32.mrf.mxu0
        %1904 = vmatprep.mubr.f32.mxu0 0.0
        %1905 = vmatmul.mubr.f32.gmra.mxu0 %v1827
        %v1906 = vpop.f32.mrf.mxu0
        %v1907 = vadd.f32 0.0, %v1906
        %v1908 = vpop.f32.mrf.mxu0
        %1909 = vdwg.mxu0
        %v1910 = vsel %vm1213, %v1293, -inf
        %1911 = vmax.xlane.f32.xlu0 %v1910
        %v1912 = vpop.xlane.xlu0 %1911
        %v1913 = vsel %vm1213, %v1298, -inf
        %1914 = vmax.xlane.f32.xlu0 %v1913
        %v1915 = vpop.xlane.xlu0 %1914
        %v1916 = vsel %vm1213, %v1380, -inf
        %1917 = vmax.xlane.f32.xlu0 %v1916
        %v1918 = vpop.xlane.xlu0 %1917
        %v1919 = vsel %vm1213, %v1385, -inf
        %1920 = vmax.xlane.f32.xlu0 %v1919
        %v1921 = vpop.xlane.xlu0 %1920
        %v1922 = vsel %vm1213, %v1467, -inf
        %1923 = vmax.xlane.f32.xlu0 %v1922
        %v1924 = vpop.xlane.xlu0 %1923
        %v1925 = vsel %vm1213, %v1472, -inf
        %1926 = vmax.xlane.f32.xlu0 %v1925
        %v1927 = vpop.xlane.xlu0 %1926
        %v1928 = vsel %vm1213, %v1554, -inf
        %1929 = vmax.xlane.f32.xlu0 %v1928
        %v1930 = vpop.xlane.xlu0 %1929
        %v1931 = vsel %vm1213, %v1559, -inf
        %1932 = vmax.xlane.f32.xlu0 %v1931
        %v1933 = vpop.xlane.xlu0 %1932
        %v1934 = vsel %vm1213, %v1641, -inf
        %1935 = vmax.xlane.f32.xlu0 %v1934
        %v1936 = vpop.xlane.xlu0 %1935
        %v1937 = vsel %vm1213, %v1646, -inf
        %1938 = vmax.xlane.f32.xlu0 %v1937
        %v1939 = vpop.xlane.xlu0 %1938
        %v1940 = vsel %vm1213, %v1728, -inf
        %1941 = vmax.xlane.f32.xlu0 %v1940
        %v1942 = vpop.xlane.xlu0 %1941
        %v1943 = vsel %vm1213, %v1733, -inf
        %1944 = vmax.xlane.f32.xlu0 %v1943
        %v1945 = vpop.xlane.xlu0 %1944
        %v1946 = vsel %vm1213, %v1815, -inf
        %1947 = vmax.xlane.f32.xlu0 %v1946
        %v1948 = vpop.xlane.xlu0 %1947
        %v1949 = vsel %vm1213, %v1820, -inf
        %1950 = vmax.xlane.f32.xlu0 %v1949
        %v1951 = vpop.xlane.xlu0 %1950
        %v1952 = vsel %vm1213, %v1902, -inf
        %1953 = vmax.xlane.f32.xlu0 %v1952
        %v1954 = vpop.xlane.xlu0 %1953
        %v1955 = vsel %vm1213, %v1907, -inf
        %1956 = vmax.xlane.f32.xlu0 %v1955
        %v1957 = vpop.xlane.xlu0 %1956
        %v1958 = vsub.f32 %v1293, %v1912
        %v1959 = vsub.f32 %v1298, %v1915
        %v1960 = vsub.f32 %v1380, %v1918
        %v1961 = vsub.f32 %v1385, %v1921
        %v1962 = vsub.f32 %v1467, %v1924
        %v1963 = vsub.f32 %v1472, %v1927
        %v1964 = vsub.f32 %v1554, %v1930
        %v1965 = vsub.f32 %v1559, %v1933
        %v1966 = vsub.f32 %v1641, %v1936
        %v1967 = vsub.f32 %v1646, %v1939
        %v1968 = vsub.f32 %v1728, %v1942
        %v1969 = vsub.f32 %v1733, %v1945
        %v1970 = vsub.f32 %v1815, %v1948
        %v1971 = vsub.f32 %v1820, %v1951
        %v1972 = vsub.f32 %v1902, %v1954
        %v1973 = vsub.f32 %v1907, %v1957
        %v1974 = vmul.f32 %v1958, 1.442695
        %v1975 = vpow.pop %v1974
        %v1976 = vmul.f32 %v1959, 1.442695
        %v1977 = vpow.pop %v1976
        %v1978 = vmul.f32 %v1960, 1.442695
        %v1979 = vpow.pop %v1978
        %v1980 = vmul.f32 %v1961, 1.442695
        %v1981 = vpow.pop %v1980
        %v1982 = vmul.f32 %v1962, 1.442695
        %v1983 = vpow.pop %v1982
        %v1984 = vmul.f32 %v1963, 1.442695
        %v1985 = vpow.pop %v1984
        %v1986 = vmul.f32 %v1964, 1.442695
        %v1987 = vpow.pop %v1986
        %v1988 = vmul.f32 %v1965, 1.442695
        %v1989 = vpow.pop %v1988
        %v1990 = vmul.f32 %v1966, 1.442695
        %v1991 = vpow.pop %v1990
        %v1992 = vmul.f32 %v1967, 1.442695
        %v1993 = vpow.pop %v1992
        %v1994 = vmul.f32 %v1968, 1.442695
        %v1995 = vpow.pop %v1994
        %v1996 = vmul.f32 %v1969, 1.442695
        %v1997 = vpow.pop %v1996
        %v1998 = vmul.f32 %v1970, 1.442695
        %v1999 = vpow.pop %v1998
        %v2000 = vmul.f32 %v1971, 1.442695
        %v2001 = vpow.pop %v2000
        %v2002 = vmul.f32 %v1972, 1.442695
        %v2003 = vpow.pop %v2002
        %v2004 = vmul.f32 %v1973, 1.442695
        %v2005 = vpow.pop %v2004
        %v2006 = vsel %vm1213, %v1975, 0.0
        %2007 = vadd.xlane.f32.xlu0 %v2006
        %v2008 = vpop.xlane.xlu0 %2007
        %v2009 = vsel %vm1213, %v1977, 0.0
        %2010 = vadd.xlane.f32.xlu0 %v2009
        %v2011 = vpop.xlane.xlu0 %2010
        %v2012 = vsel %vm1213, %v1979, 0.0
        %2013 = vadd.xlane.f32.xlu0 %v2012
        %v2014 = vpop.xlane.xlu0 %2013
        %v2015 = vsel %vm1213, %v1981, 0.0
        %2016 = vadd.xlane.f32.xlu0 %v2015
        %v2017 = vpop.xlane.xlu0 %2016
        %v2018 = vsel %vm1213, %v1983, 0.0
        %2019 = vadd.xlane.f32.xlu0 %v2018
        %v2020 = vpop.xlane.xlu0 %2019
        %v2021 = vsel %vm1213, %v1985, 0.0
        %2022 = vadd.xlane.f32.xlu0 %v2021
        %v2023 = vpop.xlane.xlu0 %2022
        %v2024 = vsel %vm1213, %v1987, 0.0
        %2025 = vadd.xlane.f32.xlu0 %v2024
        %v2026 = vpop.xlane.xlu0 %2025
        %v2027 = vsel %vm1213, %v1989, 0.0
        %2028 = vadd.xlane.f32.xlu0 %v2027
        %v2029 = vpop.xlane.xlu0 %2028
        %v2030 = vsel %vm1213, %v1991, 0.0
        %2031 = vadd.xlane.f32.xlu0 %v2030
        %v2032 = vpop.xlane.xlu0 %2031
        %v2033 = vsel %vm1213, %v1993, 0.0
        %2034 = vadd.xlane.f32.xlu0 %v2033
        %v2035 = vpop.xlane.xlu0 %2034
        %v2036 = vsel %vm1213, %v1995, 0.0
        %2037 = vadd.xlane.f32.xlu0 %v2036
        %v2038 = vpop.xlane.xlu0 %2037
        %v2039 = vsel %vm1213, %v1997, 0.0
        %2040 = vadd.xlane.f32.xlu0 %v2039
        %v2041 = vpop.xlane.xlu0 %2040
        %v2042 = vsel %vm1213, %v1999, 0.0
        %2043 = vadd.xlane.f32.xlu0 %v2042
        %v2044 = vpop.xlane.xlu0 %2043
        %v2045 = vsel %vm1213, %v2001, 0.0
        %2046 = vadd.xlane.f32.xlu0 %v2045
        %v2047 = vpop.xlane.xlu0 %2046
        %v2048 = vsel %vm1213, %v2003, 0.0
        %2049 = vadd.xlane.f32.xlu0 %v2048
        %v2050 = vpop.xlane.xlu0 %2049
        %v2051 = vsel %vm1213, %v2005, 0.0
        %2052 = vadd.xlane.f32.xlu0 %v2051
        %v2053 = vpop.xlane.xlu0 %2052
        %v2054 = vrcp.pop %v2008
        %v2055 = vrcp.pop %v2011
        %v2056 = vrcp.pop %v2014
        %v2057 = vrcp.pop %v2017
        %v2058 = vrcp.pop %v2020
        %v2059 = vrcp.pop %v2023
        %v2060 = vrcp.pop %v2026
        %v2061 = vrcp.pop %v2029
        %v2062 = vrcp.pop %v2032
        %v2063 = vrcp.pop %v2035
        %v2064 = vrcp.pop %v2038
        %v2065 = vrcp.pop %v2041
        %v2066 = vrcp.pop %v2044
        %v2067 = vrcp.pop %v2047
        %v2068 = vrcp.pop %v2050
        %v2069 = vrcp.pop %v2053
        %v2070 = vmul.f32 %v2008, %v2054
        %v2071 = vmul.f32 %v2011, %v2055
        %v2072 = vmul.f32 %v2014, %v2056
        %v2073 = vmul.f32 %v2017, %v2057
        %v2074 = vmul.f32 %v2020, %v2058
        %v2075 = vmul.f32 %v2023, %v2059
        %v2076 = vmul.f32 %v2026, %v2060
        %v2077 = vmul.f32 %v2029, %v2061
        %v2078 = vmul.f32 %v2032, %v2062
        %v2079 = vmul.f32 %v2035, %v2063
        %v2080 = vmul.f32 %v2038, %v2064
        %v2081 = vmul.f32 %v2041, %v2065
        %v2082 = vmul.f32 %v2044, %v2066
        %v2083 = vmul.f32 %v2047, %v2067
        %v2084 = vmul.f32 %v2050, %v2068
        %v2085 = vmul.f32 %v2053, %v2069
        %v2086 = vsub.f32 2.0, %v2070
        %v2087 = vsub.f32 2.0, %v2071
        %v2088 = vsub.f32 2.0, %v2072
        %v2089 = vsub.f32 2.0, %v2073
        %v2090 = vsub.f32 2.0, %v2074
        %v2091 = vsub.f32 2.0, %v2075
        %v2092 = vsub.f32 2.0, %v2076
        %v2093 = vsub.f32 2.0, %v2077
        %v2094 = vsub.f32 2.0, %v2078
        %v2095 = vsub.f32 2.0, %v2079
        %v2096 = vsub.f32 2.0, %v2080
        %v2097 = vsub.f32 2.0, %v2081
        %v2098 = vsub.f32 2.0, %v2082
        %v2099 = vsub.f32 2.0, %v2083
        %v2100 = vsub.f32 2.0, %v2084
        %v2101 = vsub.f32 2.0, %v2085
        %v2102 = vmul.f32 %v2054, %v2086
        %v2103 = vmul.f32 %v2055, %v2087
        %v2104 = vmul.f32 %v2056, %v2088
        %v2105 = vmul.f32 %v2057, %v2089
        %v2106 = vmul.f32 %v2058, %v2090
        %v2107 = vmul.f32 %v2059, %v2091
        %v2108 = vmul.f32 %v2060, %v2092
        %v2109 = vmul.f32 %v2061, %v2093
        %v2110 = vmul.f32 %v2062, %v2094
        %v2111 = vmul.f32 %v2063, %v2095
        %v2112 = vmul.f32 %v2064, %v2096
        %v2113 = vmul.f32 %v2065, %v2097
        %v2114 = vmul.f32 %v2066, %v2098
        %v2115 = vmul.f32 %v2067, %v2099
        %v2116 = vmul.f32 %v2068, %v2100
        %v2117 = vmul.f32 %v2069, %v2101
        %v2118 = vmul.f32 %v1975, %v2102
        %v2119 = vmul.f32 %v1977, %v2103
        %v2120 = vmul.f32 %v1979, %v2104
        %v2121 = vmul.f32 %v1981, %v2105
        %v2122 = vmul.f32 %v1983, %v2106
        %v2123 = vmul.f32 %v1985, %v2107
        %v2124 = vmul.f32 %v1987, %v2108
        %v2125 = vmul.f32 %v1989, %v2109
        %v2126 = vmul.f32 %v1991, %v2110
        %v2127 = vmul.f32 %v1993, %v2111
        %v2128 = vmul.f32 %v1995, %v2112
        %v2129 = vmul.f32 %v1997, %v2113
        %v2130 = vmul.f32 %v1999, %v2114
        %v2131 = vmul.f32 %v2001, %v2115
        %v2132 = vmul.f32 %v2003, %v2116
        %v2133 = vmul.f32 %v2005, %v2117
        %v2135 = vsel %vm1213, %v2118, 0
        %v2138 = vsel %vm1213, %v2119, 0
        %2140 = vmatprep.subr.mxu0 0.0
        %2141 = vmatpush1.msra.mxu0 0.0
        %2142 = vmatprep.subr.mxu0 0.0
        %2143 = vmatpush1.msra.mxu0 0.0
        %2144 = vmatprep.subr.mxu0 0.0
        %2145 = vmatpush1.msra.mxu0 0.0
        %2146 = vmatprep.subr.mxu0 0.0
        %2147 = vmatpush1.msra.mxu0 0.0
        %2148 = vmatprep.subr.mxu0 0.0
        %2149 = vmatpush1.msra.mxu0 0.0
        %2150 = vmatprep.subr.mxu0 0.0
        %2151 = vmatpush1.msra.mxu0 0.0
        %2152 = vmatprep.subr.mxu0 0.0
        %2153 = vmatpush1.msra.mxu0 0.0
        %2154 = vmatprep.subr.mxu0 0.0
        %2155 = vmatpush1.msra.mxu0 0.0
        %2156 = vmatprep.subr.mxu0 0.0
        %2157 = vmatpush1.msra.mxu0 0.0
        %2158 = vmatprep.subr.mxu0 0.0
        %2159 = vmatpush1.msra.mxu0 0.0
        %2160 = vmatprep.subr.mxu0 0.0
        %2161 = vmatpush1.msra.mxu0 0.0
        %2162 = vmatprep.subr.mxu0 0.0
        %2163 = vmatpush1.msra.mxu0 0.0
        %2164 = vmatprep.subr.mxu0 0.0
        %2165 = vmatpush1.msra.mxu0 0.0
        %2166 = vmatprep.subr.mxu0 0.0
        %2167 = vmatpush1.msra.mxu0 0.0
        %2168 = vmatprep.subr.mxu0 0.0
        %2169 = vmatpush1.msra.mxu0 %v933
        %2170 = vmatprep.subr.mxu0 0.0
        %2171 = vmatpush1.msra.mxu0 %v797
        %2172 = vmatprep.subr.mxu0 0.0
        %2173 = vmatpush2.msra.mxu0 0.0
        %2174 = vmatprep.subr.mxu0 0.0
        %2175 = vmatpush2.msra.mxu0 0.0
        %2176 = vmatprep.subr.mxu0 0.0
        %2177 = vmatpush2.msra.mxu0 0.0
        %2178 = vmatprep.subr.mxu0 0.0
        %2179 = vmatpush2.msra.mxu0 0.0
        %2180 = vmatprep.subr.mxu0 0.0
        %2181 = vmatpush2.msra.mxu0 0.0
        %2182 = vmatprep.subr.mxu0 0.0
        %2183 = vmatpush2.msra.mxu0 0.0
        %2184 = vmatprep.subr.mxu0 0.0
        %2185 = vmatpush2.msra.mxu0 0.0
        %2186 = vmatprep.subr.mxu0 0.0
        %2187 = vmatpush2.msra.mxu0 0.0
        %2188 = vmatprep.subr.mxu0 0.0
        %2189 = vmatpush2.msra.mxu0 0.0
        %2190 = vmatprep.subr.mxu0 0.0
        %2191 = vmatpush2.msra.mxu0 0.0
        %2192 = vmatprep.subr.mxu0 0.0
        %2193 = vmatpush2.msra.mxu0 0.0
        %2194 = vmatprep.subr.mxu0 0.0
        %2195 = vmatpush2.msra.mxu0 0.0
        %2196 = vmatprep.subr.mxu0 0.0
        %2197 = vmatpush2.msra.mxu0 0.0
        %2198 = vmatprep.subr.mxu0 0.0
        %2199 = vmatpush2.msra.mxu0 0.0
        %2200 = vmatprep.subr.mxu0 0.0
        %2201 = vmatpush2.msra.mxu0 0.0
        %2202 = vmatprep.subr.mxu0 0.0
        %2203 = vmatpush2.msra.mxu0 0.0
        %2204 = vmatprep.mubr.f32.mxu0 0.0
        %2205 = vmatmul.mubr.f32.gmra.mxu0 %v2135
        %v2206 = vpop.f32.mrf.mxu0
        %v2207 = vadd.f32 0.0, %v2206
        %v2208 = vpop.f32.mrf.mxu0
        %2209 = vmatprep.mubr.f32.mxu0 0.0
        %2210 = vmatmul.mubr.f32.gmra.mxu0 %v2138
        %v2211 = vpop.f32.mrf.mxu0
        %v2212 = vadd.f32 0.0, %v2211
        %v2213 = vpop.f32.mrf.mxu0
        %2214 = vdwg.mxu0
        %v2216 = vsel %vm1213, %v2120, 0
        %v2219 = vsel %vm1213, %v2121, 0
        %2221 = vmatprep.subr.mxu0 0.0
        %2222 = vmatpush1.msra.mxu0 0.0
        %2223 = vmatprep.subr.mxu0 0.0
        %2224 = vmatpush1.msra.mxu0 0.0
        %2225 = vmatprep.subr.mxu0 0.0
        %2226 = vmatpush1.msra.mxu0 0.0
        %2227 = vmatprep.subr.mxu0 0.0
        %2228 = vmatpush1.msra.mxu0 0.0
        %2229 = vmatprep.subr.mxu0 0.0
        %2230 = vmatpush1.msra.mxu0 0.0
        %2231 = vmatprep.subr.mxu0 0.0
        %2232 = vmatpush1.msra.mxu0 0.0
        %2233 = vmatprep.subr.mxu0 0.0
        %2234 = vmatpush1.msra.mxu0 0.0
        %2235 = vmatprep.subr.mxu0 0.0
        %2236 = vmatpush1.msra.mxu0 0.0
        %2237 = vmatprep.subr.mxu0 0.0
        %2238 = vmatpush1.msra.mxu0 0.0
        %2239 = vmatprep.subr.mxu0 0.0
        %2240 = vmatpush1.msra.mxu0 0.0
        %2241 = vmatprep.subr.mxu0 0.0
        %2242 = vmatpush1.msra.mxu0 0.0
        %2243 = vmatprep.subr.mxu0 0.0
        %2244 = vmatpush1.msra.mxu0 0.0
        %2245 = vmatprep.subr.mxu0 0.0
        %2246 = vmatpush1.msra.mxu0 0.0
        %2247 = vmatprep.subr.mxu0 0.0
        %2248 = vmatpush1.msra.mxu0 0.0
        %2249 = vmatprep.subr.mxu0 0.0
        %2250 = vmatpush1.msra.mxu0 %v934
        %2251 = vmatprep.subr.mxu0 0.0
        %2252 = vmatpush1.msra.mxu0 %v798
        %2253 = vmatprep.subr.mxu0 0.0
        %2254 = vmatpush2.msra.mxu0 0.0
        %2255 = vmatprep.subr.mxu0 0.0
        %2256 = vmatpush2.msra.mxu0 0.0
        %2257 = vmatprep.subr.mxu0 0.0
        %2258 = vmatpush2.msra.mxu0 0.0
        %2259 = vmatprep.subr.mxu0 0.0
        %2260 = vmatpush2.msra.mxu0 0.0
        %2261 = vmatprep.subr.mxu0 0.0
        %2262 = vmatpush2.msra.mxu0 0.0
        %2263 = vmatprep.subr.mxu0 0.0
        %2264 = vmatpush2.msra.mxu0 0.0
        %2265 = vmatprep.subr.mxu0 0.0
        %2266 = vmatpush2.msra.mxu0 0.0
        %2267 = vmatprep.subr.mxu0 0.0
        %2268 = vmatpush2.msra.mxu0 0.0
        %2269 = vmatprep.subr.mxu0 0.0
        %2270 = vmatpush2.msra.mxu0 0.0
        %2271 = vmatprep.subr.mxu0 0.0
        %2272 = vmatpush2.msra.mxu0 0.0
        %2273 = vmatprep.subr.mxu0 0.0
        %2274 = vmatpush2.msra.mxu0 0.0
        %2275 = vmatprep.subr.mxu0 0.0
        %2276 = vmatpush2.msra.mxu0 0.0
        %2277 = vmatprep.subr.mxu0 0.0
        %2278 = vmatpush2.msra.mxu0 0.0
        %2279 = vmatprep.subr.mxu0 0.0
        %2280 = vmatpush2.msra.mxu0 0.0
        %2281 = vmatprep.subr.mxu0 0.0
        %2282 = vmatpush2.msra.mxu0 0.0
        %2283 = vmatprep.subr.mxu0 0.0
        %2284 = vmatpush2.msra.mxu0 0.0
        %2285 = vmatprep.mubr.f32.mxu0 0.0
        %2286 = vmatmul.mubr.f32.gmra.mxu0 %v2216
        %v2287 = vpop.f32.mrf.mxu0
        %v2288 = vadd.f32 0.0, %v2287
        %v2289 = vpop.f32.mrf.mxu0
        %2290 = vmatprep.mubr.f32.mxu0 0.0
        %2291 = vmatmul.mubr.f32.gmra.mxu0 %v2219
        %v2292 = vpop.f32.mrf.mxu0
        %v2293 = vadd.f32 0.0, %v2292
        %v2294 = vpop.f32.mrf.mxu0
        %2295 = vdwg.mxu0
        %v2297 = vsel %vm1213, %v2122, 0
        %v2300 = vsel %vm1213, %v2123, 0
        %2302 = vmatprep.subr.mxu0 0.0
        %2303 = vmatpush1.msra.mxu0 0.0
        %2304 = vmatprep.subr.mxu0 0.0
        %2305 = vmatpush1.msra.mxu0 0.0
        %2306 = vmatprep.subr.mxu0 0.0
        %2307 = vmatpush1.msra.mxu0 0.0
        %2308 = vmatprep.subr.mxu0 0.0
        %2309 = vmatpush1.msra.mxu0 0.0
        %2310 = vmatprep.subr.mxu0 0.0
        %2311 = vmatpush1.msra.mxu0 0.0
        %2312 = vmatprep.subr.mxu0 0.0
        %2313 = vmatpush1.msra.mxu0 0.0
        %2314 = vmatprep.subr.mxu0 0.0
        %2315 = vmatpush1.msra.mxu0 0.0
        %2316 = vmatprep.subr.mxu0 0.0
        %2317 = vmatpush1.msra.mxu0 0.0
        %2318 = vmatprep.subr.mxu0 0.0
        %2319 = vmatpush1.msra.mxu0 0.0
        %2320 = vmatprep.subr.mxu0 0.0
        %2321 = vmatpush1.msra.mxu0 0.0
        %2322 = vmatprep.subr.mxu0 0.0
        %2323 = vmatpush1.msra.mxu0 0.0
        %2324 = vmatprep.subr.mxu0 0.0
        %2325 = vmatpush1.msra.mxu0 0.0
        %2326 = vmatprep.subr.mxu0 0.0
        %2327 = vmatpush1.msra.mxu0 0.0
        %2328 = vmatprep.subr.mxu0 0.0
        %2329 = vmatpush1.msra.mxu0 0.0
        %2330 = vmatprep.subr.mxu0 0.0
        %2331 = vmatpush1.msra.mxu0 %v935
        %2332 = vmatprep.subr.mxu0 0.0
        %2333 = vmatpush1.msra.mxu0 %v799
        %2334 = vmatprep.subr.mxu0 0.0
        %2335 = vmatpush2.msra.mxu0 0.0
        %2336 = vmatprep.subr.mxu0 0.0
        %2337 = vmatpush2.msra.mxu0 0.0
        %2338 = vmatprep.subr.mxu0 0.0
        %2339 = vmatpush2.msra.mxu0 0.0
        %2340 = vmatprep.subr.mxu0 0.0
        %2341 = vmatpush2.msra.mxu0 0.0
        %2342 = vmatprep.subr.mxu0 0.0
        %2343 = vmatpush2.msra.mxu0 0.0
        %2344 = vmatprep.subr.mxu0 0.0
        %2345 = vmatpush2.msra.mxu0 0.0
        %2346 = vmatprep.subr.mxu0 0.0
        %2347 = vmatpush2.msra.mxu0 0.0
        %2348 = vmatprep.subr.mxu0 0.0
        %2349 = vmatpush2.msra.mxu0 0.0
        %2350 = vmatprep.subr.mxu0 0.0
        %2351 = vmatpush2.msra.mxu0 0.0
        %2352 = vmatprep.subr.mxu0 0.0
        %2353 = vmatpush2.msra.mxu0 0.0
        %2354 = vmatprep.subr.mxu0 0.0
        %2355 = vmatpush2.msra.mxu0 0.0
        %2356 = vmatprep.subr.mxu0 0.0
        %2357 = vmatpush2.msra.mxu0 0.0
        %2358 = vmatprep.subr.mxu0 0.0
        %2359 = vmatpush2.msra.mxu0 0.0
        %2360 = vmatprep.subr.mxu0 0.0
        %2361 = vmatpush2.msra.mxu0 0.0
        %2362 = vmatprep.subr.mxu0 0.0
        %2363 = vmatpush2.msra.mxu0 0.0
        %2364 = vmatprep.subr.mxu0 0.0
        %2365 = vmatpush2.msra.mxu0 0.0
        %2366 = vmatprep.mubr.f32.mxu0 0.0
        %2367 = vmatmul.mubr.f32.gmra.mxu0 %v2297
        %v2368 = vpop.f32.mrf.mxu0
        %v2369 = vadd.f32 0.0, %v2368
        %v2370 = vpop.f32.mrf.mxu0
        %2371 = vmatprep.mubr.f32.mxu0 0.0
        %2372 = vmatmul.mubr.f32.gmra.mxu0 %v2300
        %v2373 = vpop.f32.mrf.mxu0
        %v2374 = vadd.f32 0.0, %v2373
        %v2375 = vpop.f32.mrf.mxu0
        %2376 = vdwg.mxu0
        %v2378 = vsel %vm1213, %v2124, 0
        %v2381 = vsel %vm1213, %v2125, 0
        %2383 = vmatprep.subr.mxu0 0.0
        %2384 = vmatpush1.msra.mxu0 0.0
        %2385 = vmatprep.subr.mxu0 0.0
        %2386 = vmatpush1.msra.mxu0 0.0
        %2387 = vmatprep.subr.mxu0 0.0
        %2388 = vmatpush1.msra.mxu0 0.0
        %2389 = vmatprep.subr.mxu0 0.0
        %2390 = vmatpush1.msra.mxu0 0.0
        %2391 = vmatprep.subr.mxu0 0.0
        %2392 = vmatpush1.msra.mxu0 0.0
        %2393 = vmatprep.subr.mxu0 0.0
        %2394 = vmatpush1.msra.mxu0 0.0
        %2395 = vmatprep.subr.mxu0 0.0
        %2396 = vmatpush1.msra.mxu0 0.0
        %2397 = vmatprep.subr.mxu0 0.0
        %2398 = vmatpush1.msra.mxu0 0.0
        %2399 = vmatprep.subr.mxu0 0.0
        %2400 = vmatpush1.msra.mxu0 0.0
        %2401 = vmatprep.subr.mxu0 0.0
        %2402 = vmatpush1.msra.mxu0 0.0
        %2403 = vmatprep.subr.mxu0 0.0
        %2404 = vmatpush1.msra.mxu0 0.0
        %2405 = vmatprep.subr.mxu0 0.0
        %2406 = vmatpush1.msra.mxu0 0.0
        %2407 = vmatprep.subr.mxu0 0.0
        %2408 = vmatpush1.msra.mxu0 0.0
        %2409 = vmatprep.subr.mxu0 0.0
        %2410 = vmatpush1.msra.mxu0 0.0
        %2411 = vmatprep.subr.mxu0 0.0
        %2412 = vmatpush1.msra.mxu0 %v936
        %2413 = vmatprep.subr.mxu0 0.0
        %2414 = vmatpush1.msra.mxu0 %v800
        %2415 = vmatprep.subr.mxu0 0.0
        %2416 = vmatpush2.msra.mxu0 0.0
        %2417 = vmatprep.subr.mxu0 0.0
        %2418 = vmatpush2.msra.mxu0 0.0
        %2419 = vmatprep.subr.mxu0 0.0
        %2420 = vmatpush2.msra.mxu0 0.0
        %2421 = vmatprep.subr.mxu0 0.0
        %2422 = vmatpush2.msra.mxu0 0.0
        %2423 = vmatprep.subr.mxu0 0.0
        %2424 = vmatpush2.msra.mxu0 0.0
        %2425 = vmatprep.subr.mxu0 0.0
        %2426 = vmatpush2.msra.mxu0 0.0
        %2427 = vmatprep.subr.mxu0 0.0
        %2428 = vmatpush2.msra.mxu0 0.0
        %2429 = vmatprep.subr.mxu0 0.0
        %2430 = vmatpush2.msra.mxu0 0.0
        %2431 = vmatprep.subr.mxu0 0.0
        %2432 = vmatpush2.msra.mxu0 0.0
        %2433 = vmatprep.subr.mxu0 0.0
        %2434 = vmatpush2.msra.mxu0 0.0
        %2435 = vmatprep.subr.mxu0 0.0
        %2436 = vmatpush2.msra.mxu0 0.0
        %2437 = vmatprep.subr.mxu0 0.0
        %2438 = vmatpush2.msra.mxu0 0.0
        %2439 = vmatprep.subr.mxu0 0.0
        %2440 = vmatpush2.msra.mxu0 0.0
        %2441 = vmatprep.subr.mxu0 0.0
        %2442 = vmatpush2.msra.mxu0 0.0
        %2443 = vmatprep.subr.mxu0 0.0
        %2444 = vmatpush2.msra.mxu0 0.0
        %2445 = vmatprep.subr.mxu0 0.0
        %2446 = vmatpush2.msra.mxu0 0.0
        %2447 = vmatprep.mubr.f32.mxu0 0.0
        %2448 = vmatmul.mubr.f32.gmra.mxu0 %v2378
        %v2449 = vpop.f32.mrf.mxu0
        %v2450 = vadd.f32 0.0, %v2449
        %v2451 = vpop.f32.mrf.mxu0
        %2452 = vmatprep.mubr.f32.mxu0 0.0
        %2453 = vmatmul.mubr.f32.gmra.mxu0 %v2381
        %v2454 = vpop.f32.mrf.mxu0
        %v2455 = vadd.f32 0.0, %v2454
        %v2456 = vpop.f32.mrf.mxu0
        %2457 = vdwg.mxu0
        %v2459 = vsel %vm1213, %v2126, 0
        %v2462 = vsel %vm1213, %v2127, 0
        %2464 = vmatprep.subr.mxu0 0.0
        %2465 = vmatpush1.msra.mxu0 0.0
        %2466 = vmatprep.subr.mxu0 0.0
        %2467 = vmatpush1.msra.mxu0 0.0
        %2468 = vmatprep.subr.mxu0 0.0
        %2469 = vmatpush1.msra.mxu0 0.0
        %2470 = vmatprep.subr.mxu0 0.0
        %2471 = vmatpush1.msra.mxu0 0.0
        %2472 = vmatprep.subr.mxu0 0.0
        %2473 = vmatpush1.msra.mxu0 0.0
        %2474 = vmatprep.subr.mxu0 0.0
        %2475 = vmatpush1.msra.mxu0 0.0
        %2476 = vmatprep.subr.mxu0 0.0
        %2477 = vmatpush1.msra.mxu0 0.0
        %2478 = vmatprep.subr.mxu0 0.0
        %2479 = vmatpush1.msra.mxu0 0.0
        %2480 = vmatprep.subr.mxu0 0.0
        %2481 = vmatpush1.msra.mxu0 0.0
        %2482 = vmatprep.subr.mxu0 0.0
        %2483 = vmatpush1.msra.mxu0 0.0
        %2484 = vmatprep.subr.mxu0 0.0
        %2485 = vmatpush1.msra.mxu0 0.0
        %2486 = vmatprep.subr.mxu0 0.0
        %2487 = vmatpush1.msra.mxu0 0.0
        %2488 = vmatprep.subr.mxu0 0.0
        %2489 = vmatpush1.msra.mxu0 0.0
        %2490 = vmatprep.subr.mxu0 0.0
        %2491 = vmatpush1.msra.mxu0 0.0
        %2492 = vmatprep.subr.mxu0 0.0
        %2493 = vmatpush1.msra.mxu0 %v937
        %2494 = vmatprep.subr.mxu0 0.0
        %2495 = vmatpush1.msra.mxu0 %v801
        %2496 = vmatprep.subr.mxu0 0.0
        %2497 = vmatpush2.msra.mxu0 0.0
        %2498 = vmatprep.subr.mxu0 0.0
        %2499 = vmatpush2.msra.mxu0 0.0
        %2500 = vmatprep.subr.mxu0 0.0
        %2501 = vmatpush2.msra.mxu0 0.0
        %2502 = vmatprep.subr.mxu0 0.0
        %2503 = vmatpush2.msra.mxu0 0.0
        %2504 = vmatprep.subr.mxu0 0.0
        %2505 = vmatpush2.msra.mxu0 0.0
        %2506 = vmatprep.subr.mxu0 0.0
        %2507 = vmatpush2.msra.mxu0 0.0
        %2508 = vmatprep.subr.mxu0 0.0
        %2509 = vmatpush2.msra.mxu0 0.0
        %2510 = vmatprep.subr.mxu0 0.0
        %2511 = vmatpush2.msra.mxu0 0.0
        %2512 = vmatprep.subr.mxu0 0.0
        %2513 = vmatpush2.msra.mxu0 0.0
        %2514 = vmatprep.subr.mxu0 0.0
        %2515 = vmatpush2.msra.mxu0 0.0
        %2516 = vmatprep.subr.mxu0 0.0
        %2517 = vmatpush2.msra.mxu0 0.0
        %2518 = vmatprep.subr.mxu0 0.0
        %2519 = vmatpush2.msra.mxu0 0.0
        %2520 = vmatprep.subr.mxu0 0.0
        %2521 = vmatpush2.msra.mxu0 0.0
        %2522 = vmatprep.subr.mxu0 0.0
        %2523 = vmatpush2.msra.mxu0 0.0
        %2524 = vmatprep.subr.mxu0 0.0
        %2525 = vmatpush2.msra.mxu0 0.0
        %2526 = vmatprep.subr.mxu0 0.0
        %2527 = vmatpush2.msra.mxu0 0.0
        %2528 = vmatprep.mubr.f32.mxu0 0.0
        %2529 = vmatmul.mubr.f32.gmra.mxu0 %v2459
        %v2530 = vpop.f32.mrf.mxu0
        %v2531 = vadd.f32 0.0, %v2530
        %v2532 = vpop.f32.mrf.mxu0
        %2533 = vmatprep.mubr.f32.mxu0 0.0
        %2534 = vmatmul.mubr.f32.gmra.mxu0 %v2462
        %v2535 = vpop.f32.mrf.mxu0
        %v2536 = vadd.f32 0.0, %v2535
        %v2537 = vpop.f32.mrf.mxu0
        %2538 = vdwg.mxu0
        %v2540 = vsel %vm1213, %v2128, 0
        %v2543 = vsel %vm1213, %v2129, 0
        %2545 = vmatprep.subr.mxu0 0.0
        %2546 = vmatpush1.msra.mxu0 0.0
        %2547 = vmatprep.subr.mxu0 0.0
        %2548 = vmatpush1.msra.mxu0 0.0
        %2549 = vmatprep.subr.mxu0 0.0
        %2550 = vmatpush1.msra.mxu0 0.0
        %2551 = vmatprep.subr.mxu0 0.0
        %2552 = vmatpush1.msra.mxu0 0.0
        %2553 = vmatprep.subr.mxu0 0.0
        %2554 = vmatpush1.msra.mxu0 0.0
        %2555 = vmatprep.subr.mxu0 0.0
        %2556 = vmatpush1.msra.mxu0 0.0
        %2557 = vmatprep.subr.mxu0 0.0
        %2558 = vmatpush1.msra.mxu0 0.0
        %2559 = vmatprep.subr.mxu0 0.0
        %2560 = vmatpush1.msra.mxu0 0.0
        %2561 = vmatprep.subr.mxu0 0.0
        %2562 = vmatpush1.msra.mxu0 0.0
        %2563 = vmatprep.subr.mxu0 0.0
        %2564 = vmatpush1.msra.mxu0 0.0
        %2565 = vmatprep.subr.mxu0 0.0
        %2566 = vmatpush1.msra.mxu0 0.0
        %2567 = vmatprep.subr.mxu0 0.0
        %2568 = vmatpush1.msra.mxu0 0.0
        %2569 = vmatprep.subr.mxu0 0.0
        %2570 = vmatpush1.msra.mxu0 0.0
        %2571 = vmatprep.subr.mxu0 0.0
        %2572 = vmatpush1.msra.mxu0 0.0
        %2573 = vmatprep.subr.mxu0 0.0
        %2574 = vmatpush1.msra.mxu0 %v938
        %2575 = vmatprep.subr.mxu0 0.0
        %2576 = vmatpush1.msra.mxu0 %v802
        %2577 = vmatprep.subr.mxu0 0.0
        %2578 = vmatpush2.msra.mxu0 0.0
        %2579 = vmatprep.subr.mxu0 0.0
        %2580 = vmatpush2.msra.mxu0 0.0
        %2581 = vmatprep.subr.mxu0 0.0
        %2582 = vmatpush2.msra.mxu0 0.0
        %2583 = vmatprep.subr.mxu0 0.0
        %2584 = vmatpush2.msra.mxu0 0.0
        %2585 = vmatprep.subr.mxu0 0.0
        %2586 = vmatpush2.msra.mxu0 0.0
        %2587 = vmatprep.subr.mxu0 0.0
        %2588 = vmatpush2.msra.mxu0 0.0
        %2589 = vmatprep.subr.mxu0 0.0
        %2590 = vmatpush2.msra.mxu0 0.0
        %2591 = vmatprep.subr.mxu0 0.0
        %2592 = vmatpush2.msra.mxu0 0.0
        %2593 = vmatprep.subr.mxu0 0.0
        %2594 = vmatpush2.msra.mxu0 0.0
        %2595 = vmatprep.subr.mxu0 0.0
        %2596 = vmatpush2.msra.mxu0 0.0
        %2597 = vmatprep.subr.mxu0 0.0
        %2598 = vmatpush2.msra.mxu0 0.0
        %2599 = vmatprep.subr.mxu0 0.0
        %2600 = vmatpush2.msra.mxu0 0.0
        %2601 = vmatprep.subr.mxu0 0.0
        %2602 = vmatpush2.msra.mxu0 0.0
        %2603 = vmatprep.subr.mxu0 0.0
        %2604 = vmatpush2.msra.mxu0 0.0
        %2605 = vmatprep.subr.mxu0 0.0
        %2606 = vmatpush2.msra.mxu0 0.0
        %2607 = vmatprep.subr.mxu0 0.0
        %2608 = vmatpush2.msra.mxu0 0.0
        %2609 = vmatprep.mubr.f32.mxu0 0.0
        %2610 = vmatmul.mubr.f32.gmra.mxu0 %v2540
        %v2611 = vpop.f32.mrf.mxu0
        %v2612 = vadd.f32 0.0, %v2611
        %v2613 = vpop.f32.mrf.mxu0
        %2614 = vmatprep.mubr.f32.mxu0 0.0
        %2615 = vmatmul.mubr.f32.gmra.mxu0 %v2543
        %v2616 = vpop.f32.mrf.mxu0
        %v2617 = vadd.f32 0.0, %v2616
        %v2618 = vpop.f32.mrf.mxu0
        %2619 = vdwg.mxu0
        %v2621 = vsel %vm1213, %v2130, 0
        %v2624 = vsel %vm1213, %v2131, 0
        %2626 = vmatprep.subr.mxu0 0.0
        %2627 = vmatpush1.msra.mxu0 0.0
        %2628 = vmatprep.subr.mxu0 0.0
        %2629 = vmatpush1.msra.mxu0 0.0
        %2630 = vmatprep.subr.mxu0 0.0
        %2631 = vmatpush1.msra.mxu0 0.0
        %2632 = vmatprep.subr.mxu0 0.0
        %2633 = vmatpush1.msra.mxu0 0.0
        %2634 = vmatprep.subr.mxu0 0.0
        %2635 = vmatpush1.msra.mxu0 0.0
        %2636 = vmatprep.subr.mxu0 0.0
        %2637 = vmatpush1.msra.mxu0 0.0
        %2638 = vmatprep.subr.mxu0 0.0
        %2639 = vmatpush1.msra.mxu0 0.0
        %2640 = vmatprep.subr.mxu0 0.0
        %2641 = vmatpush1.msra.mxu0 0.0
        %2642 = vmatprep.subr.mxu0 0.0
        %2643 = vmatpush1.msra.mxu0 0.0
        %2644 = vmatprep.subr.mxu0 0.0
        %2645 = vmatpush1.msra.mxu0 0.0
        %2646 = vmatprep.subr.mxu0 0.0
        %2647 = vmatpush1.msra.mxu0 0.0
        %2648 = vmatprep.subr.mxu0 0.0
        %2649 = vmatpush1.msra.mxu0 0.0
        %2650 = vmatprep.subr.mxu0 0.0
        %2651 = vmatpush1.msra.mxu0 0.0
        %2652 = vmatprep.subr.mxu0 0.0
        %2653 = vmatpush1.msra.mxu0 0.0
        %2654 = vmatprep.subr.mxu0 0.0
        %2655 = vmatpush1.msra.mxu0 %v939
        %2656 = vmatprep.subr.mxu0 0.0
        %2657 = vmatpush1.msra.mxu0 %v803
        %2658 = vmatprep.subr.mxu0 0.0
        %2659 = vmatpush2.msra.mxu0 0.0
        %2660 = vmatprep.subr.mxu0 0.0
        %2661 = vmatpush2.msra.mxu0 0.0
        %2662 = vmatprep.subr.mxu0 0.0
        %2663 = vmatpush2.msra.mxu0 0.0
        %2664 = vmatprep.subr.mxu0 0.0
        %2665 = vmatpush2.msra.mxu0 0.0
        %2666 = vmatprep.subr.mxu0 0.0
        %2667 = vmatpush2.msra.mxu0 0.0
        %2668 = vmatprep.subr.mxu0 0.0
        %2669 = vmatpush2.msra.mxu0 0.0
        %2670 = vmatprep.subr.mxu0 0.0
        %2671 = vmatpush2.msra.mxu0 0.0
        %2672 = vmatprep.subr.mxu0 0.0
        %2673 = vmatpush2.msra.mxu0 0.0
        %2674 = vmatprep.subr.mxu0 0.0
        %2675 = vmatpush2.msra.mxu0 0.0
        %2676 = vmatprep.subr.mxu0 0.0
        %2677 = vmatpush2.msra.mxu0 0.0
        %2678 = vmatprep.subr.mxu0 0.0
        %2679 = vmatpush2.msra.mxu0 0.0
        %2680 = vmatprep.subr.mxu0 0.0
        %2681 = vmatpush2.msra.mxu0 0.0
        %2682 = vmatprep.subr.mxu0 0.0
        %2683 = vmatpush2.msra.mxu0 0.0
        %2684 = vmatprep.subr.mxu0 0.0
        %2685 = vmatpush2.msra.mxu0 0.0
        %2686 = vmatprep.subr.mxu0 0.0
        %2687 = vmatpush2.msra.mxu0 0.0
        %2688 = vmatprep.subr.mxu0 0.0
        %2689 = vmatpush2.msra.mxu0 0.0
        %2690 = vmatprep.mubr.f32.mxu0 0.0
        %2691 = vmatmul.mubr.f32.gmra.mxu0 %v2621
        %v2692 = vpop.f32.mrf.mxu0
        %v2693 = vadd.f32 0.0, %v2692
        %v2694 = vpop.f32.mrf.mxu0
        %2695 = vmatprep.mubr.f32.mxu0 0.0
        %2696 = vmatmul.mubr.f32.gmra.mxu0 %v2624
        %v2697 = vpop.f32.mrf.mxu0
        %v2698 = vadd.f32 0.0, %v2697
        %v2699 = vpop.f32.mrf.mxu0
        %2700 = vdwg.mxu0
        %v2702 = vsel %vm1213, %v2132, 0
        %v2705 = vsel %vm1213, %v2133, 0
        %2707 = vmatprep.subr.mxu0 0.0
        %2708 = vmatpush1.msra.mxu0 0.0
        %2709 = vmatprep.subr.mxu0 0.0
        %2710 = vmatpush1.msra.mxu0 0.0
        %2711 = vmatprep.subr.mxu0 0.0
        %2712 = vmatpush1.msra.mxu0 0.0
        %2713 = vmatprep.subr.mxu0 0.0
        %2714 = vmatpush1.msra.mxu0 0.0
        %2715 = vmatprep.subr.mxu0 0.0
        %2716 = vmatpush1.msra.mxu0 0.0
        %2717 = vmatprep.subr.mxu0 0.0
        %2718 = vmatpush1.msra.mxu0 0.0
        %2719 = vmatprep.subr.mxu0 0.0
        %2720 = vmatpush1.msra.mxu0 0.0
        %2721 = vmatprep.subr.mxu0 0.0
        %2722 = vmatpush1.msra.mxu0 0.0
        %2723 = vmatprep.subr.mxu0 0.0
        %2724 = vmatpush1.msra.mxu0 0.0
        %2725 = vmatprep.subr.mxu0 0.0
        %2726 = vmatpush1.msra.mxu0 0.0
        %2727 = vmatprep.subr.mxu0 0.0
        %2728 = vmatpush1.msra.mxu0 0.0
        %2729 = vmatprep.subr.mxu0 0.0
        %2730 = vmatpush1.msra.mxu0 0.0
        %2731 = vmatprep.subr.mxu0 0.0
        %2732 = vmatpush1.msra.mxu0 0.0
        %2733 = vmatprep.subr.mxu0 0.0
        %2734 = vmatpush1.msra.mxu0 0.0
        %2735 = vmatprep.subr.mxu0 0.0
        %2736 = vmatpush1.msra.mxu0 %v940
        %2737 = vmatprep.subr.mxu0 0.0
        %2738 = vmatpush1.msra.mxu0 %v804
        %2739 = vmatprep.subr.mxu0 0.0
        %2740 = vmatpush2.msra.mxu0 0.0
        %2741 = vmatprep.subr.mxu0 0.0
        %2742 = vmatpush2.msra.mxu0 0.0
        %2743 = vmatprep.subr.mxu0 0.0
        %2744 = vmatpush2.msra.mxu0 0.0
        %2745 = vmatprep.subr.mxu0 0.0
        %2746 = vmatpush2.msra.mxu0 0.0
        %2747 = vmatprep.subr.mxu0 0.0
        %2748 = vmatpush2.msra.mxu0 0.0
        %2749 = vmatprep.subr.mxu0 0.0
        %2750 = vmatpush2.msra.mxu0 0.0
        %2751 = vmatprep.subr.mxu0 0.0
        %2752 = vmatpush2.msra.mxu0 0.0
        %2753 = vmatprep.subr.mxu0 0.0
        %2754 = vmatpush2.msra.mxu0 0.0
        %2755 = vmatprep.subr.mxu0 0.0
        %2756 = vmatpush2.msra.mxu0 0.0
        %2757 = vmatprep.subr.mxu0 0.0
        %2758 = vmatpush2.msra.mxu0 0.0
        %2759 = vmatprep.subr.mxu0 0.0
        %2760 = vmatpush2.msra.mxu0 0.0
        %2761 = vmatprep.subr.mxu0 0.0
        %2762 = vmatpush2.msra.mxu0 0.0
        %2763 = vmatprep.subr.mxu0 0.0
        %2764 = vmatpush2.msra.mxu0 0.0
        %2765 = vmatprep.subr.mxu0 0.0
        %2766 = vmatpush2.msra.mxu0 0.0
        %2767 = vmatprep.subr.mxu0 0.0
        %2768 = vmatpush2.msra.mxu0 0.0
        %2769 = vmatprep.subr.mxu0 0.0
        %2770 = vmatpush2.msra.mxu0 0.0
        %2771 = vmatprep.mubr.f32.mxu0 0.0
        %2772 = vmatmul.mubr.f32.gmra.mxu0 %v2702
        %v2773 = vpop.f32.mrf.mxu0
        %v2774 = vadd.f32 0.0, %v2773
        %v2775 = vpop.f32.mrf.mxu0
        %2776 = vmatprep.mubr.f32.mxu0 0.0
        %2777 = vmatmul.mubr.f32.gmra.mxu0 %v2705
        %v2778 = vpop.f32.mrf.mxu0
        %v2779 = vadd.f32 0.0, %v2778
        %v2780 = vpop.f32.mrf.mxu0
        %2781 = vdwg.mxu0
        %v2782 = vcombine.low %v2207, %v2369
        %v2783 = vcombine.high %v2207, %v2369
        %v2785 = vunpack.c.l.s4 1983009808
        %v2786 = vunpack.c.0.s8 %v2785
        %v2787 = vlaneseq
        %v2788 = vshrl.u32 %v2787, 7
        %v2789 = vsub.s32 %v2786, %v2788
        %v2790 = vrot.slane %v2782, %v2789
        %v2792 = vunpack.c.l.s4 1983009808
        %v2793 = vunpack.c.0.s8 %v2792
        %v2794 = vlaneseq
        %v2795 = vshrl.u32 %v2794, 7
        %v2796 = vsub.s32 %v2793, %v2795
        %v2797 = vrot.slane %v2783, %v2796
        %v2798 = vcombine.low %v2288, %v2450
        %v2799 = vcombine.high %v2288, %v2450
        %v2801 = vunpack.c.l.s4 1983009808
        %v2802 = vunpack.c.0.s8 %v2801
        %v2803 = vlaneseq
        %v2804 = vshrl.u32 %v2803, 7
        %v2805 = vsub.s32 %v2802, %v2804
        %v2806 = vrot.slane %v2798, %v2805
        %v2808 = vunpack.c.l.s4 1983009808
        %v2809 = vunpack.c.0.s8 %v2808
        %v2810 = vlaneseq
        %v2811 = vshrl.u32 %v2810, 7
        %v2812 = vsub.s32 %v2809, %v2811
        %v2813 = vrot.slane %v2799, %v2812
        %v2814 = vcombine.low %v2531, %v2693
        %v2815 = vcombine.high %v2531, %v2693
        %v2817 = vunpack.c.l.s4 1983009808
        %v2818 = vunpack.c.0.s8 %v2817
        %v2819 = vlaneseq
        %v2820 = vshrl.u32 %v2819, 7
        %v2821 = vsub.s32 %v2818, %v2820
        %v2822 = vrot.slane %v2814, %v2821
        %v2824 = vunpack.c.l.s4 1983009808
        %v2825 = vunpack.c.0.s8 %v2824
        %v2826 = vlaneseq
        %v2827 = vshrl.u32 %v2826, 7
        %v2828 = vsub.s32 %v2825, %v2827
        %v2829 = vrot.slane %v2815, %v2828
        %v2830 = vcombine.low %v2612, %v2774
        %v2831 = vcombine.high %v2612, %v2774
        %v2833 = vunpack.c.l.s4 1983009808
        %v2834 = vunpack.c.0.s8 %v2833
        %v2835 = vlaneseq
        %v2836 = vshrl.u32 %v2835, 7
        %v2837 = vsub.s32 %v2834, %v2836
        %v2838 = vrot.slane %v2830, %v2837
        %v2840 = vunpack.c.l.s4 1983009808
        %v2841 = vunpack.c.0.s8 %v2840
        %v2842 = vlaneseq
        %v2843 = vshrl.u32 %v2842, 7
        %v2844 = vsub.s32 %v2841, %v2843
        %v2845 = vrot.slane %v2831, %v2844
        %v2846 = vcombine.low %v2790, %v2806
        %v2847 = vcombine.high %v2790, %v2806
        %v2849 = vunpack.c.l.s4 1934713408
        %v2850 = vunpack.c.0.s8 %v2849
        %v2851 = vlaneseq
        %v2852 = vshrl.u32 %v2851, 7
        %v2853 = vsub.s32 %v2850, %v2852
        %v2854 = vrot.slane %v2846, %v2853
        %v2856 = vunpack.c.l.s4 1934713408
        %v2857 = vunpack.c.0.s8 %v2856
        %v2858 = vlaneseq
        %v2859 = vshrl.u32 %v2858, 7
        %v2860 = vsub.s32 %v2857, %v2859
        %v2861 = vrot.slane %v2847, %v2860
        %v2862 = vcombine.low %v2797, %v2813
        %v2863 = vcombine.high %v2797, %v2813
        %v2865 = vunpack.c.l.s4 1934713408
        %v2866 = vunpack.c.0.s8 %v2865
        %v2867 = vlaneseq
        %v2868 = vshrl.u32 %v2867, 7
        %v2869 = vsub.s32 %v2866, %v2868
        %v2870 = vrot.slane %v2862, %v2869
        %v2872 = vunpack.c.l.s4 1934713408
        %v2873 = vunpack.c.0.s8 %v2872
        %v2874 = vlaneseq
        %v2875 = vshrl.u32 %v2874, 7
        %v2876 = vsub.s32 %v2873, %v2875
        %v2877 = vrot.slane %v2863, %v2876
        %v2878 = vcombine.low %v2822, %v2838
        %v2879 = vcombine.high %v2822, %v2838
        %v2881 = vunpack.c.l.s4 1934713408
        %v2882 = vunpack.c.0.s8 %v2881
        %v2883 = vlaneseq
        %v2884 = vshrl.u32 %v2883, 7
        %v2885 = vsub.s32 %v2882, %v2884
        %v2886 = vrot.slane %v2878, %v2885
        %v2888 = vunpack.c.l.s4 1934713408
        %v2889 = vunpack.c.0.s8 %v2888
        %v2890 = vlaneseq
        %v2891 = vshrl.u32 %v2890, 7
        %v2892 = vsub.s32 %v2889, %v2891
        %v2893 = vrot.slane %v2879, %v2892
        %v2894 = vcombine.low %v2829, %v2845
        %v2895 = vcombine.high %v2829, %v2845
        %v2897 = vunpack.c.l.s4 1934713408
        %v2898 = vunpack.c.0.s8 %v2897
        %v2899 = vlaneseq
        %v2900 = vshrl.u32 %v2899, 7
        %v2901 = vsub.s32 %v2898, %v2900
        %v2902 = vrot.slane %v2894, %v2901
        %v2904 = vunpack.c.l.s4 1934713408
        %v2905 = vunpack.c.0.s8 %v2904
        %v2906 = vlaneseq
        %v2907 = vshrl.u32 %v2906, 7
        %v2908 = vsub.s32 %v2905, %v2907
        %v2909 = vrot.slane %v2895, %v2908
        %v2910 = vcombine.low %v2854, %v2886
        %v2911 = vcombine.high %v2854, %v2886
        %v2912 = vcombine.low %v2861, %v2893
        %v2913 = vcombine.high %v2861, %v2893
        %v2914 = vcombine.low %v2870, %v2902
        %v2915 = vcombine.high %v2870, %v2902
        %v2916 = vcombine.low %v2877, %v2909
        %v2917 = vcombine.high %v2877, %v2909
        %v2918 = vcombine.low %v2212, %v2374
        %v2919 = vcombine.high %v2212, %v2374
        %v2921 = vunpack.c.l.s4 1983009808
        %v2922 = vunpack.c.0.s8 %v2921
        %v2923 = vlaneseq
        %v2924 = vshrl.u32 %v2923, 7
        %v2925 = vsub.s32 %v2922, %v2924
        %v2926 = vrot.slane %v2918, %v2925
        %v2928 = vunpack.c.l.s4 1983009808
        %v2929 = vunpack.c.0.s8 %v2928
        %v2930 = vlaneseq
        %v2931 = vshrl.u32 %v2930, 7
        %v2932 = vsub.s32 %v2929, %v2931
        %v2933 = vrot.slane %v2919, %v2932
        %v2934 = vcombine.low %v2293, %v2455
        %v2935 = vcombine.high %v2293, %v2455
        %v2937 = vunpack.c.l.s4 1983009808
        %v2938 = vunpack.c.0.s8 %v2937
        %v2939 = vlaneseq
        %v2940 = vshrl.u32 %v2939, 7
        %v2941 = vsub.s32 %v2938, %v2940
        %v2942 = vrot.slane %v2934, %v2941
        %v2944 = vunpack.c.l.s4 1983009808
        %v2945 = vunpack.c.0.s8 %v2944
        %v2946 = vlaneseq
        %v2947 = vshrl.u32 %v2946, 7
        %v2948 = vsub.s32 %v2945, %v2947
        %v2949 = vrot.slane %v2935, %v2948
        %v2950 = vcombine.low %v2536, %v2698
        %v2951 = vcombine.high %v2536, %v2698
        %v2953 = vunpack.c.l.s4 1983009808
        %v2954 = vunpack.c.0.s8 %v2953
        %v2955 = vlaneseq
        %v2956 = vshrl.u32 %v2955, 7
        %v2957 = vsub.s32 %v2954, %v2956
        %v2958 = vrot.slane %v2950, %v2957
        %v2960 = vunpack.c.l.s4 1983009808
        %v2961 = vunpack.c.0.s8 %v2960
        %v2962 = vlaneseq
        %v2963 = vshrl.u32 %v2962, 7
        %v2964 = vsub.s32 %v2961, %v2963
        %v2965 = vrot.slane %v2951, %v2964
        %v2966 = vcombine.low %v2617, %v2779
        %v2967 = vcombine.high %v2617, %v2779
        %v2969 = vunpack.c.l.s4 1983009808
        %v2970 = vunpack.c.0.s8 %v2969
        %v2971 = vlaneseq
        %v2972 = vshrl.u32 %v2971, 7
        %v2973 = vsub.s32 %v2970, %v2972
        %v2974 = vrot.slane %v2966, %v2973
        %v2976 = vunpack.c.l.s4 1983009808
        %v2977 = vunpack.c.0.s8 %v2976
        %v2978 = vlaneseq
        %v2979 = vshrl.u32 %v2978, 7
        %v2980 = vsub.s32 %v2977, %v2979
        %v2981 = vrot.slane %v2967, %v2980
        %v2982 = vcombine.low %v2926, %v2942
        %v2983 = vcombine.high %v2926, %v2942
        %v2985 = vunpack.c.l.s4 1934713408
        %v2986 = vunpack.c.0.s8 %v2985
        %v2987 = vlaneseq
        %v2988 = vshrl.u32 %v2987, 7
        %v2989 = vsub.s32 %v2986, %v2988
        %v2990 = vrot.slane %v2982, %v2989
        %v2992 = vunpack.c.l.s4 1934713408
        %v2993 = vunpack.c.0.s8 %v2992
        %v2994 = vlaneseq
        %v2995 = vshrl.u32 %v2994, 7
        %v2996 = vsub.s32 %v2993, %v2995
        %v2997 = vrot.slane %v2983, %v2996
        %v2998 = vcombine.low %v2933, %v2949
        %v2999 = vcombine.high %v2933, %v2949
        %v3001 = vunpack.c.l.s4 1934713408
        %v3002 = vunpack.c.0.s8 %v3001
        %v3003 = vlaneseq
        %v3004 = vshrl.u32 %v3003, 7
        %v3005 = vsub.s32 %v3002, %v3004
        %v3006 = vrot.slane %v2998, %v3005
        %v3008 = vunpack.c.l.s4 1934713408
        %v3009 = vunpack.c.0.s8 %v3008
        %v3010 = vlaneseq
        %v3011 = vshrl.u32 %v3010, 7
        %v3012 = vsub.s32 %v3009, %v3011
        %v3013 = vrot.slane %v2999, %v3012
        %v3014 = vcombine.low %v2958, %v2974
        %v3015 = vcombine.high %v2958, %v2974
        %v3017 = vunpack.c.l.s4 1934713408
        %v3018 = vunpack.c.0.s8 %v3017
        %v3019 = vlaneseq
        %v3020 = vshrl.u32 %v3019, 7
        %v3021 = vsub.s32 %v3018, %v3020
        %v3022 = vrot.slane %v3014, %v3021
        %v3024 = vunpack.c.l.s4 1934713408
        %v3025 = vunpack.c.0.s8 %v3024
        %v3026 = vlaneseq
        %v3027 = vshrl.u32 %v3026, 7
        %v3028 = vsub.s32 %v3025, %v3027
        %v3029 = vrot.slane %v3015, %v3028
        %v3030 = vcombine.low %v2965, %v2981
        %v3031 = vcombine.high %v2965, %v2981
        %v3033 = vunpack.c.l.s4 1934713408
        %v3034 = vunpack.c.0.s8 %v3033
        %v3035 = vlaneseq
        %v3036 = vshrl.u32 %v3035, 7
        %v3037 = vsub.s32 %v3034, %v3036
        %v3038 = vrot.slane %v3030, %v3037
        %v3040 = vunpack.c.l.s4 1934713408
        %v3041 = vunpack.c.0.s8 %v3040
        %v3042 = vlaneseq
        %v3043 = vshrl.u32 %v3042, 7
        %v3044 = vsub.s32 %v3041, %v3043
        %v3045 = vrot.slane %v3031, %v3044
        %v3046 = vcombine.low %v2990, %v3022
        %v3047 = vcombine.high %v2990, %v3022
        %v3048 = vcombine.low %v2997, %v3029
        %v3049 = vcombine.high %v2997, %v3029
        %v3050 = vcombine.low %v3006, %v3038
        %v3051 = vcombine.high %v3006, %v3038
        %v3052 = vcombine.low %v3013, %v3045
        %v3053 = vcombine.high %v3013, %v3045
        %3055 = vrot.lane.b32.xlu0 %v2911, 16
        %v3056 = vpop.permute.xlu0 %3055
        %3059 = vrot.lane.b32.xlu0 %v2912, 32
        %v3060 = vpop.permute.xlu0 %3059
        %3063 = vrot.lane.b32.xlu0 %v2913, 48
        %v3064 = vpop.permute.xlu0 %3063
        %3067 = vrot.lane.b32.xlu0 %v2914, 64
        %v3068 = vpop.permute.xlu0 %3067
        %3071 = vrot.lane.b32.xlu0 %v2915, 80
        %v3072 = vpop.permute.xlu0 %3071
        %3075 = vrot.lane.b32.xlu0 %v2916, 96
        %v3076 = vpop.permute.xlu0 %3075
        %3079 = vrot.lane.b32.xlu0 %v2917, 112
        %v3080 = vpop.permute.xlu0 %3079
        %3083 = vrot.lane.b32.xlu0 %v3047, 16
        %v3084 = vpop.permute.xlu0 %3083
        %3087 = vrot.lane.b32.xlu0 %v3048, 32
        %v3088 = vpop.permute.xlu0 %3087
        %3091 = vrot.lane.b32.xlu0 %v3049, 48
        %v3092 = vpop.permute.xlu0 %3091
        %3095 = vrot.lane.b32.xlu0 %v3050, 64
        %v3096 = vpop.permute.xlu0 %3095
        %3099 = vrot.lane.b32.xlu0 %v3051, 80
        %v3100 = vpop.permute.xlu0 %3099
        %3103 = vrot.lane.b32.xlu0 %v3052, 96
        %v3104 = vpop.permute.xlu0 %3103
        %3107 = vrot.lane.b32.xlu0 %v3053, 112
        %v3108 = vpop.permute.xlu0 %3107
        %v3110 = vsel %vm1213, %v2910, %v3056
        %vm3111 = vcmask 261120
        %v3112 = vsel %vm3111, %v3110, %v3060
        %vm3113 = vcmask 392192
        %v3114 = vsel %vm3113, %v3112, %v3064
        %vm3115 = vcmask 523264
        %v3116 = vsel %vm3115, %v3114, %v3068
        %vm3117 = vcmask 654336
        %v3118 = vsel %vm3117, %v3116, %v3072
        %vm3119 = vcmask 785408
        %v3120 = vsel %vm3119, %v3118, %v3076
        %vm3121 = vcmask 916480
        %v3122 = vsel %vm3121, %v3120, %v3080
        %v3123 = vsel %vm1213, %v3046, %v3084
        %v3124 = vsel %vm3111, %v3123, %v3088
        %v3125 = vsel %vm3113, %v3124, %v3092
        %v3126 = vsel %vm3115, %v3125, %v3096
        %v3127 = vsel %vm3117, %v3126, %v3100
        %v3128 = vsel %vm3119, %v3127, %v3104
        %v3129 = vsel %vm3121, %v3128, %v3108
        %3130 = vst [vmem:[%s136] sm:$0xff] %v3122
        %3131 = vst [vmem:[%s136 + $0x8] sm:$0xff] %v3129
        %s3132 = sand.u32 %s71, 1
        %s3133 = scalar_lea.sflag [#allocation3], %s3132
        %s3134 = sand.u32 %s71, 1
        %s3135 = smul.addr %s3134, 16
        %s3136 = scalar_lea.vmem [#allocation2], %s3135
        // Predicated region
        $region29: #{tpu_custom_call.1} parent=27 // pred_check
          %p3137 = pneg %p81
        $region30: #{tpu_custom_call.1} parent=27 // pred_check_branch
          %3139 = sbr.rel (%p3137) target = $region32
        $region31: #{tpu_custom_call.1} parent=27 // pred_region
          %s3141 = ssub.s32 256, 256
          %3142 = vsyncadd %s3133, %s3141
          %s3143 = smul.addr %s16, 2
          %s3144 = smul.addr %s3143, 128
          %s3145 = scalar_lea.hbm %s2, %s3144
          %s3147 = sshll.u32 %s3136, 4
          %s3148 = int_to_ptr.vmem [resolvable:$true] %s3147
          %3150 = dma.vmem_to_hbm [thread:$0]  %s3148, 256, %s3145, %s3133
        $region32: #{tpu_custom_call.1} parent=27 // pred_fallthru
          _
      $region28: #{tpu_custom_call.1} parent=5 // pred_fallthru
        _
      %p3151 = scmp.le.s32.totalorder 2, %s11
      // Predicated region
      $region33: #{tpu_custom_call.1} parent=5 // pred_check
        %p3152 = pneg %p3151
      $region34: #{tpu_custom_call.1} parent=5 // pred_check_branch
        %3154 = sbr.rel (%p3152) target = $region36
      $region35: #{tpu_custom_call.1} parent=5 // pred_region
        %s3155 = ssub.s32 %s11, 2
        // Predicated region
        $region37: #{tpu_custom_call.1} parent=35 // pred_check
          %p3156 = pneg %p87
        $region38: #{tpu_custom_call.1} parent=35 // pred_check_branch
          %3158 = sbr.rel (%p3156) target = $region40
        $region39: #{tpu_custom_call.1} parent=35 // pred_region
          %s3159 = sand.u32 %s72, 1
          %s3160 = scalar_lea.sflag [#allocation3], %s3159
          %s3161 = sand.u32 %s72, 1
          %s3162 = smul.addr %s3161, 16
          %s3163 = scalar_lea.vmem [#allocation2], %s3162
          %3164 = dma.done %s3160, 256
        $region40: #{tpu_custom_call.1} parent=35 // pred_fallthru
          _
      $region36: #{tpu_custom_call.1} parent=5 // pred_fallthru
        _
    $region6: #{tpu_custom_call.1} parent=1 // loop_footer
      %s15 = sadd.s32 1, %s11
    $region7: #{tpu_custom_call.1} parent=1 // loop_footer_branch
      %10 = sbr.rel target = $region3
    $region8: #{tpu_custom_call.1} parent=1 // loop_exit
      _
    %3165 = vsyncpa [#allocation3], 1
    %s3166 = scalar_lea.sflag [#allocation3], 1
    %3167 = vsyncpa %s3166, 1

</llo_original>
